<compile_context>
chip_gen: v5e
topology: v5e:2x2
jax: 0.10.0
libtpu: 0.0.40
codegen_flags: <defaults>
</compile_context>

<pallas_src>
import jax
import jax.numpy as jnp
from jax.experimental import pallas as pl
from jax.experimental.pallas import tpu as pltpu


_ARG_ORDER = ('wstem', 'bstem', 'wexp', 'bexp', 'wdw', 'bdw', 'wser', 'bser',
              'wsee', 'bsee', 'wproj', 'bproj', 'whead', 'bhead', 'wcls', 'bcls')

# Approximate reciprocal in sigmoid/Swish (EUP path).  Set False for exact
# 1/x if bit-closer parity with PyTorch fp32 logits is required.
_APPROX_SIGMOID = True


# ---------------------------------------------------------------------------
# The fused kernel: whole forward pass for ONE batch element per grid step.
# ---------------------------------------------------------------------------
def _fused_forward_kernel(
        phases_ref,                     # (1, 4, OH+1, OW+1, Cin) f32 polyphase input
        wstem_ref, bstem_ref,           # (9*Cin, Cstem) bf16, (1, Cstem) f32
        wexp_ref, bexp_ref,             # (Cstem, Cmid)  bf16, (1, Cmid)  f32
        wdw_ref, bdw_ref,               # (9, Cmid) f32,       (1, Cmid)  f32
        wser_ref, bser_ref,             # (Cmid, Cse) bf16,    (1, Cse)   f32
        wsee_ref, bsee_ref,             # (Cse, Cmid) bf16,    (1, Cmid)  f32
        wproj_ref, bproj_ref,           # (Cmid, Cstem) bf16,  (1, Cstem) f32
        whead_ref, bhead_ref,           # (Cstem, Chead) bf16, (1, Chead) f32
        wcls_ref, bcls_ref,             # (Chead, Ncls) bf16,  (1, Ncls)  f32
        out_ref):                       # (1, 1, Ncls) f32
    f32, bf16 = jnp.float32, jnp.bfloat16

    OH = phases_ref.shape[2] - 1
    OW = phases_ref.shape[3] - 1
    Cin = phases_ref.shape[4]
    Cmid = wexp_ref.shape[1]
    R = OH * OW
    inv_hw = 1.0 / float(R)

    def sigmoid(v):                     # exp on the EUP + (approx) reciprocal
        return pl.reciprocal(1.0 + jnp.exp(-v), approx=_APPROX_SIGMOID)

    def swish(v):
        return v * sigmoid(v)

    # ---- _conv_stem: 3x3 / stride-2 / SAME conv + BN(folded) + Swish --------
    # Lane-concatenate the 9 polyphase taps -> ONE (R, 9*Cin) x (9*Cin, Cstem)
    # MXU matmul (instead of 9 K=Cin matmuls accumulated on the VPU).
    taps = []
    for ky in range(3):
        for kx in range(3):
            sy, qy = ky % 2, ky // 2
            sx, qx = kx % 2, kx // 2
            taps.append(phases_ref[0, 2 * sy + sx, qy:qy + OH, qx:qx + OW, :])
    patch = jnp.concatenate(taps, axis=-1).reshape(R, 9 * Cin)
    x = swish(jnp.dot(patch.astype(bf16), wstem_ref[...],
                      preferred_element_type=f32) + bstem_ref[...])   # (R, Cstem)

    # ---- MBConv: expand 1x1 + BN + Swish (MXU) -------------------------------
    h = swish(jnp.dot(x.astype(bf16), wexp_ref[...],
                      preferred_element_type=f32) + bexp_ref[...])    # (R, Cmid)

    # ---- MBConv: depthwise 3x3 stride-1 SAME + BN + Swish --------------------
    # Rows are r = y*OW + x; spatial +/-1 shifts become sublane rolls (XLU)
    # with boundary masks.  Separable structure: 4 rolls + 9 FMAs, no padded
    # VMEM scratch, no zero-fill, no window reloads.
    ridx = jax.lax.broadcasted_iota(jnp.int32, (R, 1), 0)
    xcol = ridx % OW
    ok_xm = xcol != 0                    # (x-1) valid
    ok_xp = xcol != OW - 1               # (x+1) valid
    ok_ym = ridx >= OW                   # (y-1) valid
    ok_yp = ridx < (OH - 1) * OW         # (y+1) valid

    def rollr(v, s):                     # roll rows by s (jnp.roll semantics)
        return pltpu.roll(v, s % R, axis=0)

    hxm = jnp.where(ok_xm, rollr(h, 1), 0.0)      # h at (y, x-1)
    hxp = jnp.where(ok_xp, rollr(h, -1), 0.0)     # h at (y, x+1)

    def dx_mix(ky):                      # sum over kx for a fixed kernel row
        return (hxm * wdw_ref[3 * ky + 0:3 * ky + 1, :]
                + h * wdw_ref[3 * ky + 1:3 * ky + 2, :]
                + hxp * wdw_ref[3 * ky + 2:3 * ky + 3, :])

    acc = dx_mix(1)                                                   # dy = 0
    acc = acc + jnp.where(ok_ym, rollr(dx_mix(0), OW), 0.0)           # dy = -1
    acc = acc + jnp.where(ok_yp, rollr(dx_mix(2), -OW), 0.0)          # dy = +1
    hdw = swish(acc + bdw_ref[...])                                   # (R, Cmid)

    # ---- MBConv: squeeze-and-excitation --------------------------------------
    s = jnp.sum(hdw, axis=0, keepdims=True) * inv_hw                  # (1, Cmid)
    s = swish(jnp.dot(s.astype(bf16), wser_ref[...],
                      preferred_element_type=f32) + bser_ref[...])    # (1, Cse)
    s = sigmoid(jnp.dot(s.astype(bf16), wsee_ref[...],
                        preferred_element_type=f32) + bsee_ref[...])  # (1, Cmid)
    hdw = hdw * s

    # ---- MBConv: project 1x1 + BN (linear) + identity skip -------------------
    x = x + (jnp.dot(hdw.astype(bf16), wproj_ref[...],
                     preferred_element_type=f32) + bproj_ref[...])    # (R, Cstem)

    # ---- _conv_head: 1x1 + BN + Swish ----------------------------------------
    y = swish(jnp.dot(x.astype(bf16), whead_ref[...],
                      preferred_element_type=f32) + bhead_ref[...])   # (R, Chead)

    # ---- global average pool + flatten + dropout (eval-mode: identity) -------
    feat = jnp.sum(y, axis=0, keepdims=True) * inv_hw                 # (1, Chead)
    # TODO(synk): training-mode dropout not implemented (inference semantics).

    # ---- out[:, i] = classifiers[i](feat): n_classes Linear(Chead, 1) heads --
    logits = (jnp.dot(feat.astype(bf16), wcls_ref[...],
                      preferred_element_type=f32) + bcls_ref[...])    # (1, Ncls)
    out_ref[...] = logits.reshape(1, 1, logits.shape[-1])


# ---------------------------------------------------------------------------
# Parameter construction / one-time prep (BN fold, layout, bf16 cast)
# ---------------------------------------------------------------------------
def bn_fold(gamma, beta, mean, var, eps=1e-3):
    scale = gamma / jnp.sqrt(var + eps)
    bias = beta - mean * scale
    return scale, bias


def build_params(key, in_ch=4, stem_ch=8, expand=2, se_ch=2, head_ch=32,
                 n_classes=3):
    ks = jax.random.split(key, 11)

    def nrm(k, shape, s=0.1):
        return s * jax.random.normal(k, shape, jnp.float32)

    def bn_identity(c):   # fresh BatchNorm (running_mean=0, running_var=1)
        return bn_fold(jnp.ones((c,), jnp.float32), jnp.zeros((c,), jnp.float32),
                       jnp.zeros((c,), jnp.float32), jnp.ones((c,), jnp.float32))

    mid = stem_ch * expand
    return {
        'stem_w': nrm(ks[0], (stem_ch, in_ch, 3, 3)),   'stem_bn': bn_identity(stem_ch),
        'exp_w': nrm(ks[1], (mid, stem_ch, 1, 1)),      'exp_bn': bn_identity(mid),
        'dw_w': nrm(ks[2], (mid, 1, 3, 3)),             'dw_bn': bn_identity(mid),
        'se_r_w': nrm(ks[3], (mid, se_ch)),             'se_r_b': nrm(ks[4], (se_ch,)),
        'se_e_w': nrm(ks[5], (se_ch, mid)),             'se_e_b': nrm(ks[6], (mid,)),
        'proj_w': nrm(ks[7], (stem_ch, mid, 1, 1)),     'proj_bn': bn_identity(stem_ch),
        'head_w': nrm(ks[8], (head_ch, stem_ch, 1, 1)), 'head_bn': bn_identity(head_ch),
        'cls_w': nrm(ks[9], (head_ch, n_classes)),      'cls_b': nrm(ks[10], (n_classes,)),
    }


def prepare_params(p):
    """One-time prep: fold BN into weights, kernel-layout transposes, bf16 MXU weights."""
    bf16, f32 = jnp.bfloat16, jnp.float32

    def conv_mat(w_oihw, scale):          # -> (kh*kw, cin, cout), BN scale folded
        cout, cin, kh, kw = w_oihw.shape
        w = jnp.transpose(w_oihw, (2, 3, 1, 0)).reshape(kh * kw, cin, cout)
        return w * scale[None, None, :]

    stem = conv_mat(p['stem_w'], p['stem_bn'][0])        # (9, Cin, Cstem)
    kk, cin, cstem = stem.shape
    return {
        # stem is stored as one (9*Cin, Cstem) matrix -> single-matmul stem conv
        'wstem': stem.reshape(kk * cin, cstem).astype(bf16),
        'bstem': p['stem_bn'][1].reshape(1, -1).astype(f32),
        'wexp': conv_mat(p['exp_w'], p['exp_bn'][0])[0].astype(bf16),
        'bexp': p['exp_bn'][1].reshape(1, -1).astype(f32),
        'wdw': (jnp.transpose(p['dw_w'][:, 0], (1, 2, 0)).reshape(9, -1)
                * p['dw_bn'][0][None, :]).astype(f32),
        'bdw': p['dw_bn'][1].reshape(1, -1).astype(f32),
        'wser': p['se_r_w'].astype(bf16),
        'bser': p['se_r_b'].reshape(1, -1).astype(f32),
        'wsee': p['se_e_w'].astype(bf16),
        'bsee': p['se_e_b'].reshape(1, -1).astype(f32),
        'wproj': conv_mat(p['proj_w'], p['proj_bn'][0])[0].astype(bf16),
        'bproj': p['proj_bn'][1].reshape(1, -1).astype(f32),
        'whead': conv_mat(p['head_w'], p['head_bn'][0])[0].astype(bf16),
        'bhead': p['head_bn'][1].reshape(1, -1).astype(f32),
        'wcls': p['cls_w'].astype(bf16),                 # now bf16 like all MXU operands
        'bcls': p['cls_b'].reshape(1, -1).astype(f32),
    }


# ---------------------------------------------------------------------------
# Forward wrapper: input prep (transpose / SAME pad / polyphase) + pallas_call
# with a batch grid ("parallel" for v7x's 2 TCs, auto double-buffering).
# ---------------------------------------------------------------------------
def efficientnet_gen1vsrest_forward(x_nchw, kp):
    """Returns (B, n_classes); out[:, i] = classifiers[i](features(x))."""
    x = jnp.transpose(x_nchw, (0, 2, 3, 1)).astype(jnp.float32)       # NCHW -> NHWC
    B, H, W, Cin = x.shape
    OH, OW = -(-H // 2), -(-W // 2)                                   # stride-2 SAME
    pad_t = max((OH - 1) * 2 + 3 - H, 0) // 2
    pad_l = max((OW - 1) * 2 + 3 - W, 0) // 2
    Hp, Wp = 2 * OH + 2, 2 * OW + 2                                   # even extents
    xp = jnp.pad(x, ((0, 0), (pad_t, Hp - H - pad_t),
                     (pad_l, Wp - W - pad_l), (0, 0)))
    # Polyphase split of the padded input (pure repartition, no im2col blow-up).
    # TODO(synk): for large inputs, move this phase selection behind a BlockSpec
    #             index_map so the input is only read once from HBM.
    phases = jnp.stack(
        [xp[:, sy::2, sx::2, :] for sy in (0, 1) for sx in (0, 1)], axis=1)
    # phases: (B, 4, OH+1, OW+1, Cin)

    Cstem = kp['wexp'].shape[0]
    Cmid = kp['wexp'].shape[1]
    Cse = kp['wser'].shape[1]
    Chead = kp['whead'].shape[1]
    Ncls = kp['wcls'].shape[1]
    R = OH * OW
    weight_args = [kp[k] for k in _ARG_ORDER]

    def _full_spec(a):                    # whole (tiny) weight resident in VMEM
        nd = a.ndim
        return pl.BlockSpec(a.shape, lambda b, _n=nd: (0,) * _n)

    in_specs = [pl.BlockSpec((1, 4, OH + 1, OW + 1, Cin),
                             lambda b: (b, 0, 0, 0, 0))]
    in_specs += [_full_spec(w) for w in weight_args]

    flops = B * (2 * R * (9 * Cin * Cstem + Cstem * Cmid + 9 * Cmid
                          + Cmid * Cstem + Cstem * Chead)
                 + 2 * (Cmid * Cse + Cse * Cmid + Chead * Ncls))
    transcendentals = B * (R * (Cstem + 2 * Cmid + Chead) + Cse + Cmid)
    bytes_accessed = (int(phases.size) * 4
                      + sum(int(v.size) * v.dtype.itemsize for v in weight_args)
                      + B * Ncls * 4)

    out3 = pl.pallas_call(
        _fused_forward_kernel,
        out_shape=jax.ShapeDtypeStruct((B, 1, Ncls), jnp.float32),
        grid=(B,),
        in_specs=in_specs,
        out_specs=pl.BlockSpec((1, 1, Ncls), lambda b: (b, 0, 0)),
        compiler_params=pltpu.CompilerParams(
            dimension_semantics=("parallel",),
            vmem_limit_bytes=32 * 1024 * 1024),
        cost_estimate=pl.CostEstimate(flops=int(flops),
                                      transcendentals=int(transcendentals),
                                      bytes_accessed=int(bytes_accessed)),
    )(phases, *weight_args)
    return out3.reshape(B, Ncls)


# ---------------------------------------------------------------------------
# Pure-JAX (XLA, f32) reference with identical semantics — for verification.
# ---------------------------------------------------------------------------
def _reference_forward(x_nchw, p):
    def conv(v, w_oihw, stride, groups=1):
        w = jnp.transpose(w_oihw, (2, 3, 1, 0))                       # OIHW -> HWIO
        return jax.lax.conv_general_dilated(
            v, w, (stride, stride), 'SAME',
            dimension_numbers=('NHWC', 'HWIO', 'NHWC'),
            feature_group_count=groups)

    def bn(v, sb):
        return v * sb[0] + sb[1]

    def swish(v):
        return v * jax.nn.sigmoid(v)

    x = jnp.transpose(x_nchw, (0, 2, 3, 1)).astype(jnp.float32)
    x = swish(bn(conv(x, p['stem_w'], 2), p['stem_bn']))
    inp = x
    h = swish(bn(conv(x, p['exp_w'], 1), p['exp_bn']))
    h = swish(bn(conv(h, p['dw_w'], 1, groups=h.shape[-1]), p['dw_bn']))
    s = jnp.mean(h, axis=(1, 2))
    s = swish(s @ p['se_r_w'] + p['se_r_b'])
    s = jax.nn.sigmoid(s @ p['se_e_w'] + p['se_e_b'])
    h = h * s[:, None, None, :]
    h = bn(conv(h, p['proj_w'], 1), p['proj_bn'])
    x = h + inp
    x = swish(bn(conv(x, p['head_w'], 1), p['head_bn']))
    feat = jnp.mean(x, axis=(1, 2))
    return feat @ p['cls_w'] + p['cls_b']


if __name__ == "__main__":
    key = jax.random.PRNGKey(0)
    kx, kparam = jax.random.split(key)

    # NCHW input, like the PyTorch module (batch=2, in_channels=4, 16x16)
    x = jax.random.normal(kx, (2, 4, 16, 16), jnp.float32)
    raw_params = build_params(kparam, in_ch=4, stem_ch=8, expand=2, se_ch=2,
                              head_ch=32, n_classes=3)
    kparams = prepare_params(raw_params)      # one-time weight prep (not per call)

    fwd = jax.jit(efficientnet_gen1vsrest_forward)
    out = fwd(x, kparams)
    jax.block_until_ready(out)

    assert out.shape == (2, 3) and out.dtype == jnp.float32
    assert bool(jnp.all(jnp.isfinite(out)))
    ref = _reference_forward(x, raw_params)
    assert bool(jnp.allclose(out, ref, atol=5e-2, rtol=5e-2)), (
        f"max abs err {float(jnp.max(jnp.abs(out - ref)))}")
    print("KERNEL_OK")
</pallas_src>

<mosaic_0001>
module attributes {stable_mosaic.version = 11 : i64} {
  func.func @_fused_forward_kernel(%arg0: i32, %arg1: memref<1x4x9x9x4xf32, #tpu.memory_space<vmem>>, %arg2: memref<36x8xbf16, #tpu.memory_space<vmem>>, %arg3: memref<1x8xf32, #tpu.memory_space<vmem>>, %arg4: memref<8x16xbf16, #tpu.memory_space<vmem>>, %arg5: memref<1x16xf32, #tpu.memory_space<vmem>>, %arg6: memref<9x16xf32, #tpu.memory_space<vmem>>, %arg7: memref<1x16xf32, #tpu.memory_space<vmem>>, %arg8: memref<16x2xbf16, #tpu.memory_space<vmem>>, %arg9: memref<1x2xf32, #tpu.memory_space<vmem>>, %arg10: memref<2x16xbf16, #tpu.memory_space<vmem>>, %arg11: memref<1x16xf32, #tpu.memory_space<vmem>>, %arg12: memref<16x8xbf16, #tpu.memory_space<vmem>>, %arg13: memref<1x8xf32, #tpu.memory_space<vmem>>, %arg14: memref<8x32xbf16, #tpu.memory_space<vmem>>, %arg15: memref<1x32xf32, #tpu.memory_space<vmem>>, %arg16: memref<32x3xbf16, #tpu.memory_space<vmem>>, %arg17: memref<1x3xf32, #tpu.memory_space<vmem>>, %arg18: memref<1x1x3xf32, #tpu.memory_space<vmem>>) attributes {dimension_semantics = [#tpu.dimension_semantics<parallel>], iteration_bounds = array<i64: 2>, scalar_prefetch = 0 : i64, scratch_operands = 0 : i64, tpu.core_type = #tpu.core_type<tc>, window_params = [{transform_indices = @transform_0, window_bounds = array<i64: 1, 4, 9, 9, 4>}, {pipeline_mode = #tpu.pipeline_mode<synchronous>, transform_indices = @transform_1, window_bounds = array<i64: 36, 8>}, {pipeline_mode = #tpu.pipeline_mode<synchronous>, transform_indices = @transform_2, window_bounds = array<i64: 1, 8>}, {pipeline_mode = #tpu.pipeline_mode<synchronous>, transform_indices = @transform_3, window_bounds = array<i64: 8, 16>}, {pipeline_mode = #tpu.pipeline_mode<synchronous>, transform_indices = @transform_4, window_bounds = array<i64: 1, 16>}, {pipeline_mode = #tpu.pipeline_mode<synchronous>, transform_indices = @transform_5, window_bounds = array<i64: 9, 16>}, {pipeline_mode = #tpu.pipeline_mode<synchronous>, transform_indices = @transform_6, window_bounds = array<i64: 1, 16>}, {pipeline_mode = #tpu.pipeline_mode<synchronous>, transform_indices = @transform_7, window_bounds = array<i64: 16, 2>}, {pipeline_mode = #tpu.pipeline_mode<synchronous>, transform_indices = @transform_8, window_bounds = array<i64: 1, 2>}, {pipeline_mode = #tpu.pipeline_mode<synchronous>, transform_indices = @transform_9, window_bounds = array<i64: 2, 16>}, {pipeline_mode = #tpu.pipeline_mode<synchronous>, transform_indices = @transform_10, window_bounds = array<i64: 1, 16>}, {pipeline_mode = #tpu.pipeline_mode<synchronous>, transform_indices = @transform_11, window_bounds = array<i64: 16, 8>}, {pipeline_mode = #tpu.pipeline_mode<synchronous>, transform_indices = @transform_12, window_bounds = array<i64: 1, 8>}, {pipeline_mode = #tpu.pipeline_mode<synchronous>, transform_indices = @transform_13, window_bounds = array<i64: 8, 32>}, {pipeline_mode = #tpu.pipeline_mode<synchronous>, transform_indices = @transform_14, window_bounds = array<i64: 1, 32>}, {pipeline_mode = #tpu.pipeline_mode<synchronous>, transform_indices = @transform_15, window_bounds = array<i64: 32, 3>}, {pipeline_mode = #tpu.pipeline_mode<synchronous>, transform_indices = @transform_16, window_bounds = array<i64: 1, 3>}, {transform_indices = @transform_17, window_bounds = array<i64: 1, 1, 3>}]} {
    %c0 = arith.constant 0 : index
    %c0_0 = arith.constant 0 : index
    %c0_1 = arith.constant 0 : index
    %c0_2 = arith.constant 0 : index
    %c0_3 = arith.constant 0 : index
    %0 = vector.load %arg1[%c0, %c0_0, %c0_1, %c0_2, %c0_3] : memref<1x4x9x9x4xf32, #tpu.memory_space<vmem>>, vector<1x1x8x8x4xf32>
    %1 = vector.shape_cast %0 : vector<1x1x8x8x4xf32> to vector<8x8x4xf32>
    %c0_4 = arith.constant 0 : index
    %c1 = arith.constant 1 : index
    %c0_5 = arith.constant 0 : index
    %c0_6 = arith.constant 0 : index
    %c0_7 = arith.constant 0 : index
    %2 = vector.load %arg1[%c0_4, %c1, %c0_5, %c0_6, %c0_7] : memref<1x4x9x9x4xf32, #tpu.memory_space<vmem>>, vector<1x1x8x8x4xf32>
    %3 = vector.shape_cast %2 : vector<1x1x8x8x4xf32> to vector<8x8x4xf32>
    %c0_8 = arith.constant 0 : index
    %c0_9 = arith.constant 0 : index
    %c0_10 = arith.constant 0 : index
    %c1_11 = arith.constant 1 : index
    %c0_12 = arith.constant 0 : index
    %4 = vector.load %arg1[%c0_8, %c0_9, %c0_10, %c1_11, %c0_12] : memref<1x4x9x9x4xf32, #tpu.memory_space<vmem>>, vector<1x1x8x8x4xf32>
    %5 = vector.shape_cast %4 : vector<1x1x8x8x4xf32> to vector<8x8x4xf32>
    %c0_13 = arith.constant 0 : index
    %c2 = arith.constant 2 : index
    %c0_14 = arith.constant 0 : index
    %c0_15 = arith.constant 0 : index
    %c0_16 = arith.constant 0 : index
    %6 = vector.load %arg1[%c0_13, %c2, %c0_14, %c0_15, %c0_16] : memref<1x4x9x9x4xf32, #tpu.memory_space<vmem>>, vector<1x1x8x8x4xf32>
    %7 = vector.shape_cast %6 : vector<1x1x8x8x4xf32> to vector<8x8x4xf32>
    %c0_17 = arith.constant 0 : index
    %c3 = arith.constant 3 : index
    %c0_18 = arith.constant 0 : index
    %c0_19 = arith.constant 0 : index
    %c0_20 = arith.constant 0 : index
    %8 = vector.load %arg1[%c0_17, %c3, %c0_18, %c0_19, %c0_20] : memref<1x4x9x9x4xf32, #tpu.memory_space<vmem>>, vector<1x1x8x8x4xf32>
    %9 = vector.shape_cast %8 : vector<1x1x8x8x4xf32> to vector<8x8x4xf32>
    %c0_21 = arith.constant 0 : index
    %c2_22 = arith.constant 2 : index
    %c0_23 = arith.constant 0 : index
    %c1_24 = arith.constant 1 : index
    %c0_25 = arith.constant 0 : index
    %10 = vector.load %arg1[%c0_21, %c2_22, %c0_23, %c1_24, %c0_25] : memref<1x4x9x9x4xf32, #tpu.memory_space<vmem>>, vector<1x1x8x8x4xf32>
    %11 = vector.shape_cast %10 : vector<1x1x8x8x4xf32> to vector<8x8x4xf32>
    %c0_26 = arith.constant 0 : index
    %c0_27 = arith.constant 0 : index
    %c1_28 = arith.constant 1 : index
    %c0_29 = arith.constant 0 : index
    %c0_30 = arith.constant 0 : index
    %12 = vector.load %arg1[%c0_26, %c0_27, %c1_28, %c0_29, %c0_30] : memref<1x4x9x9x4xf32, #tpu.memory_space<vmem>>, vector<1x1x8x8x4xf32>
    %13 = vector.shape_cast %12 : vector<1x1x8x8x4xf32> to vector<8x8x4xf32>
    %c0_31 = arith.constant 0 : index
    %c1_32 = arith.constant 1 : index
    %c1_33 = arith.constant 1 : index
    %c0_34 = arith.constant 0 : index
    %c0_35 = arith.constant 0 : index
    %14 = vector.load %arg1[%c0_31, %c1_32, %c1_33, %c0_34, %c0_35] : memref<1x4x9x9x4xf32, #tpu.memory_space<vmem>>, vector<1x1x8x8x4xf32>
    %15 = vector.shape_cast %14 : vector<1x1x8x8x4xf32> to vector<8x8x4xf32>
    %c0_36 = arith.constant 0 : index
    %c0_37 = arith.constant 0 : index
    %c1_38 = arith.constant 1 : index
    %c1_39 = arith.constant 1 : index
    %c0_40 = arith.constant 0 : index
    %16 = vector.load %arg1[%c0_36, %c0_37, %c1_38, %c1_39, %c0_40] : memref<1x4x9x9x4xf32, #tpu.memory_space<vmem>>, vector<1x1x8x8x4xf32>
    %17 = vector.shape_cast %16 : vector<1x1x8x8x4xf32> to vector<8x8x4xf32>
    %18 = tpu.concatenate %1, %3, %5, %7, %9, %11, %13, %15, %17 in 2 : vector<8x8x4xf32>, vector<8x8x4xf32>, vector<8x8x4xf32>, vector<8x8x4xf32>, vector<8x8x4xf32>, vector<8x8x4xf32>, vector<8x8x4xf32>, vector<8x8x4xf32>, vector<8x8x4xf32> -> vector<8x8x36xf32>
    %19 = vector.shape_cast %18 : vector<8x8x36xf32> to vector<64x36xf32>
    %20 = arith.truncf %19 : vector<64x36xf32> to vector<64x36xbf16>
    %c0_41 = arith.constant 0 : index
    %c0_42 = arith.constant 0 : index
    %21 = vector.load %arg2[%c0_41, %c0_42] : memref<36x8xbf16, #tpu.memory_space<vmem>>, vector<36x8xbf16>
    %cst = arith.constant dense<0.000000e+00> : vector<64x8xf32>
    %22 = tpu.matmul %20, %21, %cst {dimension_numbers = #tpu.dot_dimension_numbers<[1], [0], [0], [1], [0, 0, 1, 1], [], []>} : vector<64x36xbf16>, vector<36x8xbf16>, vector<64x8xf32> -> vector<64x8xf32>
    %c0_43 = arith.constant 0 : index
    %c0_44 = arith.constant 0 : index
    %23 = vector.load %arg3[%c0_43, %c0_44] : memref<1x8xf32, #tpu.memory_space<vmem>>, vector<1x8xf32>
    %24 = vector.broadcast %23 : vector<1x8xf32> to vector<64x8xf32>
    %25 = arith.addf %22, %24 : vector<64x8xf32>
    %cst_45 = arith.constant 0.000000e+00 : f32
    %26 = vector.broadcast %cst_45 : f32 to vector<64x8xf32>
    %27 = arith.subf %26, %25 : vector<64x8xf32>
    %28 = math.exp %27 : vector<64x8xf32>
    %cst_46 = arith.constant 1.000000e+00 : f32
    %29 = vector.broadcast %cst_46 : f32 to vector<64x8xf32>
    %30 = arith.addf %29, %28 : vector<64x8xf32>
    %31 = tpu.reciprocal %30 {approx = true} : vector<64x8xf32> -> vector<64x8xf32>
    %32 = arith.mulf %25, %31 : vector<64x8xf32>
    %33 = arith.truncf %32 : vector<64x8xf32> to vector<64x8xbf16>
    %c0_47 = arith.constant 0 : index
    %c0_48 = arith.constant 0 : index
    %34 = vector.load %arg4[%c0_47, %c0_48] : memref<8x16xbf16, #tpu.memory_space<vmem>>, vector<8x16xbf16>
    %cst_49 = arith.constant dense<0.000000e+00> : vector<64x16xf32>
    %35 = tpu.matmul %33, %34, %cst_49 {dimension_numbers = #tpu.dot_dimension_numbers<[1], [0], [0], [1], [0, 0, 1, 1], [], []>} : vector<64x8xbf16>, vector<8x16xbf16>, vector<64x16xf32> -> vector<64x16xf32>
    %c0_50 = arith.constant 0 : index
    %c0_51 = arith.constant 0 : index
    %36 = vector.load %arg5[%c0_50, %c0_51] : memref<1x16xf32, #tpu.memory_space<vmem>>, vector<1x16xf32>
    %37 = vector.broadcast %36 : vector<1x16xf32> to vector<64x16xf32>
    %38 = arith.addf %35, %37 : vector<64x16xf32>
    %cst_52 = arith.constant 0.000000e+00 : f32
    %39 = vector.broadcast %cst_52 : f32 to vector<64x16xf32>
    %40 = arith.subf %39, %38 : vector<64x16xf32>
    %41 = math.exp %40 : vector<64x16xf32>
    %cst_53 = arith.constant 1.000000e+00 : f32
    %42 = vector.broadcast %cst_53 : f32 to vector<64x16xf32>
    %43 = arith.addf %42, %41 : vector<64x16xf32>
    %44 = tpu.reciprocal %43 {approx = true} : vector<64x16xf32> -> vector<64x16xf32>
    %45 = arith.mulf %38, %44 : vector<64x16xf32>
    %46 = tpu.iota {dimensions = array<i32: 0>} : vector<64x1xi32>
    %c8_i32 = arith.constant 8 : i32
    %c0_i32 = arith.constant 0 : i32
    %47 = arith.cmpi eq, %c8_i32, %c0_i32 : i32
    %c1_i32 = arith.constant 1 : i32
    %48 = arith.select %47, %c1_i32, %c8_i32 : i32
    %49 = vector.broadcast %48 : i32 to vector<64x1xi32>
    %50 = arith.remsi %46, %49 : vector<64x1xi32>
    %c0_i32_54 = arith.constant 0 : i32
    %51 = vector.broadcast %c0_i32_54 : i32 to vector<64x1xi32>
    %52 = arith.cmpi ne, %50, %51 : vector<64x1xi32>
    %c0_i32_55 = arith.constant 0 : i32
    %53 = vector.broadcast %c0_i32_55 : i32 to vector<64x1xi32>
    %54 = arith.cmpi slt, %50, %53 : vector<64x1xi32>
    %c0_i32_56 = arith.constant 0 : i32
    %55 = arith.cmpi slt, %48, %c0_i32_56 : i32
    %56 = vector.broadcast %55 : i1 to vector<64x1xi1>
    %57 = vector.broadcast %56 : vector<64x1xi1> to vector<64x1xi1>
    %58 = arith.xori %54, %57 : vector<64x1xi1>
    %59 = arith.andi %58, %52 : vector<64x1xi1>
    %60 = vector.broadcast %48 : i32 to vector<64x1xi32>
    %61 = arith.addi %50, %60 : vector<64x1xi32>
    %62 = arith.select %59, %61, %50 : vector<64x1xi1>, vector<64x1xi32>
    %c0_i32_57 = arith.constant 0 : i32
    %63 = vector.broadcast %c0_i32_57 : i32 to vector<64x1xi32>
    %64 = arith.cmpi ne, %62, %63 : vector<64x1xi32>
    %c7_i32 = arith.constant 7 : i32
    %65 = vector.broadcast %c7_i32 : i32 to vector<64x1xi32>
    %66 = arith.cmpi ne, %62, %65 : vector<64x1xi32>
    %c8_i32_58 = arith.constant 8 : i32
    %67 = vector.broadcast %c8_i32_58 : i32 to vector<64x1xi32>
    %68 = arith.cmpi sge, %46, %67 : vector<64x1xi32>
    %c56_i32 = arith.constant 56 : i32
    %69 = vector.broadcast %c56_i32 : i32 to vector<64x1xi32>
    %70 = arith.cmpi slt, %46, %69 : vector<64x1xi32>
    %c1_i32_59 = arith.constant 1 : i32
    %71 = tpu.dynamic_rotate %45 by %c1_i32_59 dim 0 : vector<64x16xf32>, i32 -> vector<64x16xf32>
    %cst_60 = arith.constant 0.000000e+00 : f32
    %72 = vector.shape_cast %64 : vector<64x1xi1> to vector<64x1xi1>
    %73 = vector.broadcast %72 : vector<64x1xi1> to vector<64x16xi1>
    %74 = vector.broadcast %cst_60 : f32 to vector<64x16xf32>
    %75 = arith.select %73, %71, %74 : vector<64x16xi1>, vector<64x16xf32>
    %c63_i32 = arith.constant 63 : i32
    %76 = tpu.dynamic_rotate %45 by %c63_i32 dim 0 : vector<64x16xf32>, i32 -> vector<64x16xf32>
    %cst_61 = arith.constant 0.000000e+00 : f32
    %77 = vector.shape_cast %66 : vector<64x1xi1> to vector<64x1xi1>
    %78 = vector.broadcast %77 : vector<64x1xi1> to vector<64x16xi1>
    %79 = vector.broadcast %cst_61 : f32 to vector<64x16xf32>
    %80 = arith.select %78, %76, %79 : vector<64x16xi1>, vector<64x16xf32>
    %c3_62 = arith.constant 3 : index
    %c0_63 = arith.constant 0 : index
    %81 = vector.load %arg6[%c3_62, %c0_63] : memref<9x16xf32, #tpu.memory_space<vmem>>, vector<1x16xf32>
    %82 = vector.broadcast %81 : vector<1x16xf32> to vector<64x16xf32>
    %83 = arith.mulf %75, %82 : vector<64x16xf32>
    %c4 = arith.constant 4 : index
    %c0_64 = arith.constant 0 : index
    %84 = vector.load %arg6[%c4, %c0_64] : memref<9x16xf32, #tpu.memory_space<vmem>>, vector<1x16xf32>
    %85 = vector.broadcast %84 : vector<1x16xf32> to vector<64x16xf32>
    %86 = arith.mulf %45, %85 : vector<64x16xf32>
    %87 = arith.addf %83, %86 : vector<64x16xf32>
    %c5 = arith.constant 5 : index
    %c0_65 = arith.constant 0 : index
    %88 = vector.load %arg6[%c5, %c0_65] : memref<9x16xf32, #tpu.memory_space<vmem>>, vector<1x16xf32>
    %89 = vector.broadcast %88 : vector<1x16xf32> to vector<64x16xf32>
    %90 = arith.mulf %80, %89 : vector<64x16xf32>
    %91 = arith.addf %87, %90 : vector<64x16xf32>
    %c0_66 = arith.constant 0 : index
    %c0_67 = arith.constant 0 : index
    %92 = vector.load %arg6[%c0_66, %c0_67] : memref<9x16xf32, #tpu.memory_space<vmem>>, vector<1x16xf32>
    %93 = vector.broadcast %92 : vector<1x16xf32> to vector<64x16xf32>
    %94 = arith.mulf %75, %93 : vector<64x16xf32>
    %c1_68 = arith.constant 1 : index
    %c0_69 = arith.constant 0 : index
    %95 = vector.load %arg6[%c1_68, %c0_69] : memref<9x16xf32, #tpu.memory_space<vmem>>, vector<1x16xf32>
    %96 = vector.broadcast %95 : vector<1x16xf32> to vector<64x16xf32>
    %97 = arith.mulf %45, %96 : vector<64x16xf32>
    %98 = arith.addf %94, %97 : vector<64x16xf32>
    %c2_70 = arith.constant 2 : index
    %c0_71 = arith.constant 0 : index
    %99 = vector.load %arg6[%c2_70, %c0_71] : memref<9x16xf32, #tpu.memory_space<vmem>>, vector<1x16xf32>
    %100 = vector.broadcast %99 : vector<1x16xf32> to vector<64x16xf32>
    %101 = arith.mulf %80, %100 : vector<64x16xf32>
    %102 = arith.addf %98, %101 : vector<64x16xf32>
    %c8_i32_72 = arith.constant 8 : i32
    %103 = tpu.dynamic_rotate %102 by %c8_i32_72 dim 0 : vector<64x16xf32>, i32 -> vector<64x16xf32>
    %cst_73 = arith.constant 0.000000e+00 : f32
    %104 = vector.shape_cast %68 : vector<64x1xi1> to vector<64x1xi1>
    %105 = vector.broadcast %104 : vector<64x1xi1> to vector<64x16xi1>
    %106 = vector.broadcast %cst_73 : f32 to vector<64x16xf32>
    %107 = arith.select %105, %103, %106 : vector<64x16xi1>, vector<64x16xf32>
    %108 = arith.addf %91, %107 : vector<64x16xf32>
    %c6 = arith.constant 6 : index
    %c0_74 = arith.constant 0 : index
    %109 = vector.load %arg6[%c6, %c0_74] : memref<9x16xf32, #tpu.memory_space<vmem>>, vector<1x16xf32>
    %110 = vector.broadcast %109 : vector<1x16xf32> to vector<64x16xf32>
    %111 = arith.mulf %75, %110 : vector<64x16xf32>
    %c7 = arith.constant 7 : index
    %c0_75 = arith.constant 0 : index
    %112 = vector.load %arg6[%c7, %c0_75] : memref<9x16xf32, #tpu.memory_space<vmem>>, vector<1x16xf32>
    %113 = vector.broadcast %112 : vector<1x16xf32> to vector<64x16xf32>
    %114 = arith.mulf %45, %113 : vector<64x16xf32>
    %115 = arith.addf %111, %114 : vector<64x16xf32>
    %c8 = arith.constant 8 : index
    %c0_76 = arith.constant 0 : index
    %116 = vector.load %arg6[%c8, %c0_76] : memref<9x16xf32, #tpu.memory_space<vmem>>, vector<1x16xf32>
    %117 = vector.broadcast %116 : vector<1x16xf32> to vector<64x16xf32>
    %118 = arith.mulf %80, %117 : vector<64x16xf32>
    %119 = arith.addf %115, %118 : vector<64x16xf32>
    %c56_i32_77 = arith.constant 56 : i32
    %120 = tpu.dynamic_rotate %119 by %c56_i32_77 dim 0 : vector<64x16xf32>, i32 -> vector<64x16xf32>
    %cst_78 = arith.constant 0.000000e+00 : f32
    %121 = vector.shape_cast %70 : vector<64x1xi1> to vector<64x1xi1>
    %122 = vector.broadcast %121 : vector<64x1xi1> to vector<64x16xi1>
    %123 = vector.broadcast %cst_78 : f32 to vector<64x16xf32>
    %124 = arith.select %122, %120, %123 : vector<64x16xi1>, vector<64x16xf32>
    %125 = arith.addf %108, %124 : vector<64x16xf32>
    %c0_79 = arith.constant 0 : index
    %c0_80 = arith.constant 0 : index
    %126 = vector.load %arg7[%c0_79, %c0_80] : memref<1x16xf32, #tpu.memory_space<vmem>>, vector<1x16xf32>
    %127 = vector.broadcast %126 : vector<1x16xf32> to vector<64x16xf32>
    %128 = arith.addf %125, %127 : vector<64x16xf32>
    %cst_81 = arith.constant 0.000000e+00 : f32
    %129 = vector.broadcast %cst_81 : f32 to vector<64x16xf32>
    %130 = arith.subf %129, %128 : vector<64x16xf32>
    %131 = math.exp %130 : vector<64x16xf32>
    %cst_82 = arith.constant 1.000000e+00 : f32
    %132 = vector.broadcast %cst_82 : f32 to vector<64x16xf32>
    %133 = arith.addf %132, %131 : vector<64x16xf32>
    %134 = tpu.reciprocal %133 {approx = true} : vector<64x16xf32> -> vector<64x16xf32>
    %135 = arith.mulf %128, %134 : vector<64x16xf32>
    %cst_83 = arith.constant dense<0.000000e+00> : vector<16xf32>
    %136 = vector.multi_reduction <add>, %135, %cst_83 [0] : vector<64x16xf32> to vector<16xf32>
    %137 = vector.shape_cast %136 : vector<16xf32> to vector<1x16xf32>
    %cst_84 = arith.constant 1.562500e-02 : f32
    %138 = vector.broadcast %cst_84 : f32 to vector<1x16xf32>
    %139 = arith.mulf %137, %138 : vector<1x16xf32>
    %140 = arith.truncf %139 : vector<1x16xf32> to vector<1x16xbf16>
    %c0_85 = arith.constant 0 : index
    %c0_86 = arith.constant 0 : index
    %141 = vector.load %arg8[%c0_85, %c0_86] : memref<16x2xbf16, #tpu.memory_space<vmem>>, vector<16x2xbf16>
    %cst_87 = arith.constant dense<0.000000e+00> : vector<1x2xf32>
    %142 = tpu.matmul %140, %141, %cst_87 {dimension_numbers = #tpu.dot_dimension_numbers<[1], [0], [0], [1], [0, 0, 1, 1], [], []>} : vector<1x16xbf16>, vector<16x2xbf16>, vector<1x2xf32> -> vector<1x2xf32>
    %c0_88 = arith.constant 0 : index
    %c0_89 = arith.constant 0 : index
    %143 = vector.load %arg9[%c0_88, %c0_89] : memref<1x2xf32, #tpu.memory_space<vmem>>, vector<1x2xf32>
    %144 = arith.addf %142, %143 : vector<1x2xf32>
    %cst_90 = arith.constant 0.000000e+00 : f32
    %145 = vector.broadcast %cst_90 : f32 to vector<1x2xf32>
    %146 = arith.subf %145, %144 : vector<1x2xf32>
    %147 = math.exp %146 : vector<1x2xf32>
    %cst_91 = arith.constant 1.000000e+00 : f32
    %148 = vector.broadcast %cst_91 : f32 to vector<1x2xf32>
    %149 = arith.addf %148, %147 : vector<1x2xf32>
    %150 = tpu.reciprocal %149 {approx = true} : vector<1x2xf32> -> vector<1x2xf32>
    %151 = arith.mulf %144, %150 : vector<1x2xf32>
    %152 = arith.truncf %151 : vector<1x2xf32> to vector<1x2xbf16>
    %c0_92 = arith.constant 0 : index
    %c0_93 = arith.constant 0 : index
    %153 = vector.load %arg10[%c0_92, %c0_93] : memref<2x16xbf16, #tpu.memory_space<vmem>>, vector<2x16xbf16>
    %cst_94 = arith.constant dense<0.000000e+00> : vector<1x16xf32>
    %154 = tpu.matmul %152, %153, %cst_94 {dimension_numbers = #tpu.dot_dimension_numbers<[1], [0], [0], [1], [0, 0, 1, 1], [], []>} : vector<1x2xbf16>, vector<2x16xbf16>, vector<1x16xf32> -> vector<1x16xf32>
    %c0_95 = arith.constant 0 : index
    %c0_96 = arith.constant 0 : index
    %155 = vector.load %arg11[%c0_95, %c0_96] : memref<1x16xf32, #tpu.memory_space<vmem>>, vector<1x16xf32>
    %156 = arith.addf %154, %155 : vector<1x16xf32>
    %cst_97 = arith.constant 0.000000e+00 : f32
    %157 = vector.broadcast %cst_97 : f32 to vector<1x16xf32>
    %158 = arith.subf %157, %156 : vector<1x16xf32>
    %159 = math.exp %158 : vector<1x16xf32>
    %cst_98 = arith.constant 1.000000e+00 : f32
    %160 = vector.broadcast %cst_98 : f32 to vector<1x16xf32>
    %161 = arith.addf %160, %159 : vector<1x16xf32>
    %162 = tpu.reciprocal %161 {approx = true} : vector<1x16xf32> -> vector<1x16xf32>
    %163 = vector.broadcast %162 : vector<1x16xf32> to vector<64x16xf32>
    %164 = arith.mulf %135, %163 : vector<64x16xf32>
    %165 = arith.truncf %164 : vector<64x16xf32> to vector<64x16xbf16>
    %c0_99 = arith.constant 0 : index
    %c0_100 = arith.constant 0 : index
    %166 = vector.load %arg12[%c0_99, %c0_100] : memref<16x8xbf16, #tpu.memory_space<vmem>>, vector<16x8xbf16>
    %cst_101 = arith.constant dense<0.000000e+00> : vector<64x8xf32>
    %167 = tpu.matmul %165, %166, %cst_101 {dimension_numbers = #tpu.dot_dimension_numbers<[1], [0], [0], [1], [0, 0, 1, 1], [], []>} : vector<64x16xbf16>, vector<16x8xbf16>, vector<64x8xf32> -> vector<64x8xf32>
    %c0_102 = arith.constant 0 : index
    %c0_103 = arith.constant 0 : index
    %168 = vector.load %arg13[%c0_102, %c0_103] : memref<1x8xf32, #tpu.memory_space<vmem>>, vector<1x8xf32>
    %169 = vector.broadcast %168 : vector<1x8xf32> to vector<64x8xf32>
    %170 = arith.addf %167, %169 : vector<64x8xf32>
    %171 = arith.addf %32, %170 : vector<64x8xf32>
    %172 = arith.truncf %171 : vector<64x8xf32> to vector<64x8xbf16>
    %c0_104 = arith.constant 0 : index
    %c0_105 = arith.constant 0 : index
    %173 = vector.load %arg14[%c0_104, %c0_105] : memref<8x32xbf16, #tpu.memory_space<vmem>>, vector<8x32xbf16>
    %cst_106 = arith.constant dense<0.000000e+00> : vector<64x32xf32>
    %174 = tpu.matmul %172, %173, %cst_106 {dimension_numbers = #tpu.dot_dimension_numbers<[1], [0], [0], [1], [0, 0, 1, 1], [], []>} : vector<64x8xbf16>, vector<8x32xbf16>, vector<64x32xf32> -> vector<64x32xf32>
    %c0_107 = arith.constant 0 : index
    %c0_108 = arith.constant 0 : index
    %175 = vector.load %arg15[%c0_107, %c0_108] : memref<1x32xf32, #tpu.memory_space<vmem>>, vector<1x32xf32>
    %176 = vector.broadcast %175 : vector<1x32xf32> to vector<64x32xf32>
    %177 = arith.addf %174, %176 : vector<64x32xf32>
    %cst_109 = arith.constant 0.000000e+00 : f32
    %178 = vector.broadcast %cst_109 : f32 to vector<64x32xf32>
    %179 = arith.subf %178, %177 : vector<64x32xf32>
    %180 = math.exp %179 : vector<64x32xf32>
    %cst_110 = arith.constant 1.000000e+00 : f32
    %181 = vector.broadcast %cst_110 : f32 to vector<64x32xf32>
    %182 = arith.addf %181, %180 : vector<64x32xf32>
    %183 = tpu.reciprocal %182 {approx = true} : vector<64x32xf32> -> vector<64x32xf32>
    %184 = arith.mulf %177, %183 : vector<64x32xf32>
    %cst_111 = arith.constant dense<0.000000e+00> : vector<32xf32>
    %185 = vector.multi_reduction <add>, %184, %cst_111 [0] : vector<64x32xf32> to vector<32xf32>
    %186 = vector.shape_cast %185 : vector<32xf32> to vector<1x32xf32>
    %cst_112 = arith.constant 1.562500e-02 : f32
    %187 = vector.broadcast %cst_112 : f32 to vector<1x32xf32>
    %188 = arith.mulf %186, %187 : vector<1x32xf32>
    %189 = arith.truncf %188 : vector<1x32xf32> to vector<1x32xbf16>
    %c0_113 = arith.constant 0 : index
    %c0_114 = arith.constant 0 : index
    %190 = vector.load %arg16[%c0_113, %c0_114] : memref<32x3xbf16, #tpu.memory_space<vmem>>, vector<32x3xbf16>
    %cst_115 = arith.constant dense<0.000000e+00> : vector<1x3xf32>
    %191 = tpu.matmul %189, %190, %cst_115 {dimension_numbers = #tpu.dot_dimension_numbers<[1], [0], [0], [1], [0, 0, 1, 1], [], []>} : vector<1x32xbf16>, vector<32x3xbf16>, vector<1x3xf32> -> vector<1x3xf32>
    %c0_116 = arith.constant 0 : index
    %c0_117 = arith.constant 0 : index
    %192 = vector.load %arg17[%c0_116, %c0_117] : memref<1x3xf32, #tpu.memory_space<vmem>>, vector<1x3xf32>
    %193 = arith.addf %191, %192 : vector<1x3xf32>
    %194 = vector.shape_cast %193 : vector<1x3xf32> to vector<1x1x3xf32>
    %c0_118 = arith.constant 0 : index
    %c0_119 = arith.constant 0 : index
    %c0_120 = arith.constant 0 : index
    %195 = vector.load %arg18[%c0_118, %c0_119, %c0_120] : memref<1x1x3xf32, #tpu.memory_space<vmem>>, vector<1x1x3xf32>
    tpu.vector_store %arg18[%c0_118, %c0_119, %c0_120], %194 {strides = array<i32>} : memref<1x1x3xf32, #tpu.memory_space<vmem>>, vector<1x1x3xf32>,
    return
  }
  func.func @transform_0(%arg0: i32) -> (i32, i32, i32, i32, i32) {
    %c0_i32 = arith.constant 0 : i32
    %c0_i32_0 = arith.constant 0 : i32
    %c0_i32_1 = arith.constant 0 : i32
    %c0_i32_2 = arith.constant 0 : i32
    %c0_i32_3 = arith.constant 0 : i32
    return %arg0, %c0_i32, %c0_i32_0, %c0_i32_1, %c0_i32_2 : i32, i32, i32, i32, i32
  }
  func.func @transform_1(%arg0: i32) -> (i32, i32) {
    %c0_i32 = arith.constant 0 : i32
    %c0_i32_0 = arith.constant 0 : i32
    %c0_i32_1 = arith.constant 0 : i32
    return %c0_i32, %c0_i32_0 : i32, i32
  }
  func.func @transform_2(%arg0: i32) -> (i32, i32) {
    %c0_i32 = arith.constant 0 : i32
    %c0_i32_0 = arith.constant 0 : i32
    %c0_i32_1 = arith.constant 0 : i32
    return %c0_i32, %c0_i32_0 : i32, i32
  }
  func.func @transform_3(%arg0: i32) -> (i32, i32) {
    %c0_i32 = arith.constant 0 : i32
    %c0_i32_0 = arith.constant 0 : i32
    %c0_i32_1 = arith.constant 0 : i32
    return %c0_i32, %c0_i32_0 : i32, i32
  }
  func.func @transform_4(%arg0: i32) -> (i32, i32) {
    %c0_i32 = arith.constant 0 : i32
    %c0_i32_0 = arith.constant 0 : i32
    %c0_i32_1 = arith.constant 0 : i32
    return %c0_i32, %c0_i32_0 : i32, i32
  }
  func.func @transform_5(%arg0: i32) -> (i32, i32) {
    %c0_i32 = arith.constant 0 : i32
    %c0_i32_0 = arith.constant 0 : i32
    %c0_i32_1 = arith.constant 0 : i32
    return %c0_i32, %c0_i32_0 : i32, i32
  }
  func.func @transform_6(%arg0: i32) -> (i32, i32) {
    %c0_i32 = arith.constant 0 : i32
    %c0_i32_0 = arith.constant 0 : i32
    %c0_i32_1 = arith.constant 0 : i32
    return %c0_i32, %c0_i32_0 : i32, i32
  }
  func.func @transform_7(%arg0: i32) -> (i32, i32) {
    %c0_i32 = arith.constant 0 : i32
    %c0_i32_0 = arith.constant 0 : i32
    %c0_i32_1 = arith.constant 0 : i32
    return %c0_i32, %c0_i32_0 : i32, i32
  }
  func.func @transform_8(%arg0: i32) -> (i32, i32) {
    %c0_i32 = arith.constant 0 : i32
    %c0_i32_0 = arith.constant 0 : i32
    %c0_i32_1 = arith.constant 0 : i32
    return %c0_i32, %c0_i32_0 : i32, i32
  }
  func.func @transform_9(%arg0: i32) -> (i32, i32) {
    %c0_i32 = arith.constant 0 : i32
    %c0_i32_0 = arith.constant 0 : i32
    %c0_i32_1 = arith.constant 0 : i32
    return %c0_i32, %c0_i32_0 : i32, i32
  }
  func.func @transform_10(%arg0: i32) -> (i32, i32) {
    %c0_i32 = arith.constant 0 : i32
    %c0_i32_0 = arith.constant 0 : i32
    %c0_i32_1 = arith.constant 0 : i32
    return %c0_i32, %c0_i32_0 : i32, i32
  }
  func.func @transform_11(%arg0: i32) -> (i32, i32) {
    %c0_i32 = arith.constant 0 : i32
    %c0_i32_0 = arith.constant 0 : i32
    %c0_i32_1 = arith.constant 0 : i32
    return %c0_i32, %c0_i32_0 : i32, i32
  }
  func.func @transform_12(%arg0: i32) -> (i32, i32) {
    %c0_i32 = arith.constant 0 : i32
    %c0_i32_0 = arith.constant 0 : i32
    %c0_i32_1 = arith.constant 0 : i32
    return %c0_i32, %c0_i32_0 : i32, i32
  }
  func.func @transform_13(%arg0: i32) -> (i32, i32) {
    %c0_i32 = arith.constant 0 : i32
    %c0_i32_0 = arith.constant 0 : i32
    %c0_i32_1 = arith.constant 0 : i32
    return %c0_i32, %c0_i32_0 : i32, i32
  }
  func.func @transform_14(%arg0: i32) -> (i32, i32) {
    %c0_i32 = arith.constant 0 : i32
    %c0_i32_0 = arith.constant 0 : i32
    %c0_i32_1 = arith.constant 0 : i32
    return %c0_i32, %c0_i32_0 : i32, i32
  }
  func.func @transform_15(%arg0: i32) -> (i32, i32) {
    %c0_i32 = arith.constant 0 : i32
    %c0_i32_0 = arith.constant 0 : i32
    %c0_i32_1 = arith.constant 0 : i32
    return %c0_i32, %c0_i32_0 : i32, i32
  }
  func.func @transform_16(%arg0: i32) -> (i32, i32) {
    %c0_i32 = arith.constant 0 : i32
    %c0_i32_0 = arith.constant 0 : i32
    %c0_i32_1 = arith.constant 0 : i32
    return %c0_i32, %c0_i32_0 : i32, i32
  }
  func.func @transform_17(%arg0: i32) -> (i32, i32, i32) {
    %c0_i32 = arith.constant 0 : i32
    %c0_i32_0 = arith.constant 0 : i32
    %c0_i32_1 = arith.constant 0 : i32
    return %arg0, %c0_i32, %c0_i32_0 : i32, i32, i32
  }
}

</mosaic_0001>

<llo_original>
// kernel: efficientnet_gen1vsrest_forward.1
$region0: #{efficientnet_gen1vsrest_forward.1}
  #allocation0 [shape = 'u32[]', space=smem, size = 0x4, offset = 0x4, fixed_abs, tag = 'smem constant byte address 0x4 - core index']
  #allocation1 [shape = 'u32[72,128]{1,0:T(1,128)}', space=vmem, size = 0x9000, scoped, tag = 'internal scratch']
  %s0 = inlined_call_operand.vmem [shape: f32[2,4,9,9,4], index: 0, kind: input, shape index: {}]
  %s1 = inlined_call_operand.vmem [shape: bf16[36,8], index: 1, kind: input, shape index: {}]
  %s2 = inlined_call_operand.vmem [shape: f32[1,8], index: 2, kind: input, shape index: {}]
  %s3 = inlined_call_operand.vmem [shape: bf16[8,16], index: 3, kind: input, shape index: {}]
  %s4 = inlined_call_operand.vmem [shape: f32[1,16], index: 4, kind: input, shape index: {}]
  %s5 = inlined_call_operand.vmem [shape: f32[9,16], index: 5, kind: input, shape index: {}]
  %s6 = inlined_call_operand.vmem [shape: f32[1,16], index: 6, kind: input, shape index: {}]
  %s7 = inlined_call_operand.vmem [shape: bf16[16,2], index: 7, kind: input, shape index: {}]
  %s8 = inlined_call_operand.vmem [shape: f32[1,2], index: 8, kind: input, shape index: {}]
  %s9 = inlined_call_operand.vmem [shape: bf16[2,16], index: 9, kind: input, shape index: {}]
  %s10 = inlined_call_operand.vmem [shape: f32[1,16], index: 10, kind: input, shape index: {}]
  %s11 = inlined_call_operand.vmem [shape: bf16[16,8], index: 11, kind: input, shape index: {}]
  %s12 = inlined_call_operand.vmem [shape: f32[1,8], index: 12, kind: input, shape index: {}]
  %s13 = inlined_call_operand.vmem [shape: bf16[8,32], index: 13, kind: input, shape index: {}]
  %s14 = inlined_call_operand.vmem [shape: f32[1,32], index: 14, kind: input, shape index: {}]
  %s15 = inlined_call_operand.vmem [shape: bf16[32,3], index: 15, kind: input, shape index: {}]
  %s16 = inlined_call_operand.vmem [shape: f32[1,3], index: 16, kind: input, shape index: {}]
  %s17 = inlined_call_operand.hbm [shape: f32[2,1,3], index: 17, kind: output, shape index: {}]
  %s18 = sld [smem:[#allocation0]]
  $region101: #{efficientnet_gen1vsrest_forward.1} parent=0
    _
  %s20 = ssub.s32 1, %s18
  %s21 = scalar_select 0, %s20, %s18
  $region1: #{efficientnet_gen1vsrest_forward.1} parent=0
    #allocation2 [shape = 'u8[1024]{0}', space=vmem, size = 0x400, scoped, tag = 'output window, operand 0']
    #allocation3 [shape = 's32[2]{0}', space=sflag, size = 0x8, scoped, tag = 'scoped memory for efficientnet_gen1vsrest_forward.1']
    %22 = vsyncpa [#allocation3], 0
    %s23 = scalar_lea.sflag [#allocation3], 1
    %24 = vsyncpa %s23, 0
    loop: start=0, step=1, limit=4
    $region2: #{efficientnet_gen1vsrest_forward.1} parent=1 // loop_pre_header
      _
    $region3: #{efficientnet_gen1vsrest_forward.1} parent=1 // loop_header
      %s26 = sphi 0, %s30
      %p27 = scmp.ge.s32.totalorder %s26, 4
      %s36 = sphi 0, %s38
      %s39 = sphi 0, %s36
      %s40 = sphi 0, %s39
      %s56 = sphi 0, %s40
      %s60 = sphi 0, %s60
      %s62 = sphi 0, %s60
      %s63 = sphi 0, %s62
      %s77 = sphi 0, %s63
      %s81 = sphi 0, %s81
      %s83 = sphi 0, %s81
      %s84 = sphi 0, %s83
      %s98 = sphi 0, %s84
      %s102 = sphi 0, %s102
      %s104 = sphi 0, %s102
      %s105 = sphi 0, %s104
      %s119 = sphi 0, %s105
      %s123 = sphi 0, %s123
      %s125 = sphi 0, %s123
      %s126 = sphi 0, %s125
      %s140 = sphi 0, %s126
      %s144 = sphi 0, %s144
      %s146 = sphi 0, %s144
      %s147 = sphi 0, %s146
      %s161 = sphi 0, %s147
      %s165 = sphi 0, %s165
      %s167 = sphi 0, %s165
      %s168 = sphi 0, %s167
      %s182 = sphi 0, %s168
      %s186 = sphi 0, %s186
      %s188 = sphi 0, %s186
      %s189 = sphi 0, %s188
      %s203 = sphi 0, %s189
      %s207 = sphi 0, %s207
      %s209 = sphi 0, %s207
      %s210 = sphi 0, %s209
      %s224 = sphi 0, %s210
      %s228 = sphi 0, %s228
      %s230 = sphi 0, %s228
      %s231 = sphi 0, %s230
      %s245 = sphi 0, %s231
      %s249 = sphi 0, %s249
      %s251 = sphi 0, %s249
      %s252 = sphi 0, %s251
      %s266 = sphi 0, %s252
      %s270 = sphi 0, %s270
      %s272 = sphi 0, %s270
      %s273 = sphi 0, %s272
      %s287 = sphi 0, %s273
      %s291 = sphi 0, %s291
      %s293 = sphi 0, %s291
      %s294 = sphi 0, %s293
      %s308 = sphi 0, %s294
      %s312 = sphi 0, %s312
      %s314 = sphi 0, %s312
      %s315 = sphi 0, %s314
      %s329 = sphi 0, %s315
      %s333 = sphi 0, %s333
      %s335 = sphi 0, %s333
      %s336 = sphi 0, %s335
      %s350 = sphi 0, %s336
      %s354 = sphi 0, %s354
      %s356 = sphi 0, %s354
      %s357 = sphi 0, %s356
      %s371 = sphi 0, %s357
      %s375 = sphi 0, %s375
      %s377 = sphi 0, %s375
      %s378 = sphi 0, %s377
      %s392 = sphi 0, %s378
      %s398 = sphi 0, %s400
      %s401 = sphi 0, %s398
      %s402 = sphi 0, %s401
      %s418 = sphi 0, %s402
    $region4: #{efficientnet_gen1vsrest_forward.1} parent=1 // loop_header_branch
      %29 = sbr.rel (%p27) target = $region8
    $region5: #{efficientnet_gen1vsrest_forward.1} parent=1 // loop_body
      %s31 = ssub.s32 %s26, 1
      %s32 = ssub.s32 %s26, 2
      %s33 = sadd.s32 %s26, 1
      %s34 = ssub.s32 %s26, %s33
      %p35 = scmp.eq.s32.totalorder %s34, 0
      %s37 = sadd.s32 %s36, 1
      %s38 = scalar_select %p35, %s36, %s37
      %p41 = pneg %p35
      %p42 = scmp.eq.s32.totalorder %s26, 1
      %p43 = por %p41, %p42
      %p44 = scmp.ne.s32.totalorder %s36, %s39
      %p45 = scmp.eq.s32.totalorder %s26, 0
      %p46 = por %p44, %p45
      %p47 = scmp.ne.s32.totalorder %s36, %s39
      %p48 = scmp.eq.s32.totalorder %s31, 1
      %p49 = por %p47, %p48
      %p50 = scmp.ne.s32.totalorder %s39, %s40
      %p51 = scmp.eq.s32.totalorder %s31, 0
      %p52 = por %p50, %p51
      %p53 = scmp.ne.s32.totalorder %s39, %s40
      %p54 = scmp.eq.s32.totalorder %s32, 1
      %p55 = por %p53, %p54
      %p57 = scmp.ne.s32.totalorder %s40, %s56
      %p58 = scmp.eq.s32.totalorder %s32, 0
      %p59 = por %p57, %p58
      %s61 = sadd.s32 %s60, 1
      %p64 = scmp.eq.s32.totalorder %s26, 1
      %p65 = scmp.ne.s32.totalorder %s60, %s62
      %p66 = scmp.eq.s32.totalorder %s26, 0
      %p67 = por %p65, %p66
      %p68 = scmp.ne.s32.totalorder %s60, %s62
      %p69 = scmp.eq.s32.totalorder %s31, 1
      %p70 = por %p68, %p69
      %p71 = scmp.ne.s32.totalorder %s62, %s63
      %p72 = scmp.eq.s32.totalorder %s31, 0
      %p73 = por %p71, %p72
      %p74 = scmp.ne.s32.totalorder %s62, %s63
      %p75 = scmp.eq.s32.totalorder %s32, 1
      %p76 = por %p74, %p75
      %p78 = scmp.ne.s32.totalorder %s63, %s77
      %p79 = scmp.eq.s32.totalorder %s32, 0
      %p80 = por %p78, %p79
      %s82 = sadd.s32 %s81, 1
      %p85 = scmp.eq.s32.totalorder %s26, 1
      %p86 = scmp.ne.s32.totalorder %s81, %s83
      %p87 = scmp.eq.s32.totalorder %s26, 0
      %p88 = por %p86, %p87
      %p89 = scmp.ne.s32.totalorder %s81, %s83
      %p90 = scmp.eq.s32.totalorder %s31, 1
      %p91 = por %p89, %p90
      %p92 = scmp.ne.s32.totalorder %s83, %s84
      %p93 = scmp.eq.s32.totalorder %s31, 0
      %p94 = por %p92, %p93
      %p95 = scmp.ne.s32.totalorder %s83, %s84
      %p96 = scmp.eq.s32.totalorder %s32, 1
      %p97 = por %p95, %p96
      %p99 = scmp.ne.s32.totalorder %s84, %s98
      %p100 = scmp.eq.s32.totalorder %s32, 0
      %p101 = por %p99, %p100
      %s103 = sadd.s32 %s102, 1
      %p106 = scmp.eq.s32.totalorder %s26, 1
      %p107 = scmp.ne.s32.totalorder %s102, %s104
      %p108 = scmp.eq.s32.totalorder %s26, 0
      %p109 = por %p107, %p108
      %p110 = scmp.ne.s32.totalorder %s102, %s104
      %p111 = scmp.eq.s32.totalorder %s31, 1
      %p112 = por %p110, %p111
      %p113 = scmp.ne.s32.totalorder %s104, %s105
      %p114 = scmp.eq.s32.totalorder %s31, 0
      %p115 = por %p113, %p114
      %p116 = scmp.ne.s32.totalorder %s104, %s105
      %p117 = scmp.eq.s32.totalorder %s32, 1
      %p118 = por %p116, %p117
      %p120 = scmp.ne.s32.totalorder %s105, %s119
      %p121 = scmp.eq.s32.totalorder %s32, 0
      %p122 = por %p120, %p121
      %s124 = sadd.s32 %s123, 1
      %p127 = scmp.eq.s32.totalorder %s26, 1
      %p128 = scmp.ne.s32.totalorder %s123, %s125
      %p129 = scmp.eq.s32.totalorder %s26, 0
      %p130 = por %p128, %p129
      %p131 = scmp.ne.s32.totalorder %s123, %s125
      %p132 = scmp.eq.s32.totalorder %s31, 1
      %p133 = por %p131, %p132
      %p134 = scmp.ne.s32.totalorder %s125, %s126
      %p135 = scmp.eq.s32.totalorder %s31, 0
      %p136 = por %p134, %p135
      %p137 = scmp.ne.s32.totalorder %s125, %s126
      %p138 = scmp.eq.s32.totalorder %s32, 1
      %p139 = por %p137, %p138
      %p141 = scmp.ne.s32.totalorder %s126, %s140
      %p142 = scmp.eq.s32.totalorder %s32, 0
      %p143 = por %p141, %p142
      %s145 = sadd.s32 %s144, 1
      %p148 = scmp.eq.s32.totalorder %s26, 1
      %p149 = scmp.ne.s32.totalorder %s144, %s146
      %p150 = scmp.eq.s32.totalorder %s26, 0
      %p151 = por %p149, %p150
      %p152 = scmp.ne.s32.totalorder %s144, %s146
      %p153 = scmp.eq.s32.totalorder %s31, 1
      %p154 = por %p152, %p153
      %p155 = scmp.ne.s32.totalorder %s146, %s147
      %p156 = scmp.eq.s32.totalorder %s31, 0
      %p157 = por %p155, %p156
      %p158 = scmp.ne.s32.totalorder %s146, %s147
      %p159 = scmp.eq.s32.totalorder %s32, 1
      %p160 = por %p158, %p159
      %p162 = scmp.ne.s32.totalorder %s147, %s161
      %p163 = scmp.eq.s32.totalorder %s32, 0
      %p164 = por %p162, %p163
      %s166 = sadd.s32 %s165, 1
      %p169 = scmp.eq.s32.totalorder %s26, 1
      %p170 = scmp.ne.s32.totalorder %s165, %s167
      %p171 = scmp.eq.s32.totalorder %s26, 0
      %p172 = por %p170, %p171
      %p173 = scmp.ne.s32.totalorder %s165, %s167
      %p174 = scmp.eq.s32.totalorder %s31, 1
      %p175 = por %p173, %p174
      %p176 = scmp.ne.s32.totalorder %s167, %s168
      %p177 = scmp.eq.s32.totalorder %s31, 0
      %p178 = por %p176, %p177
      %p179 = scmp.ne.s32.totalorder %s167, %s168
      %p180 = scmp.eq.s32.totalorder %s32, 1
      %p181 = por %p179, %p180
      %p183 = scmp.ne.s32.totalorder %s168, %s182
      %p184 = scmp.eq.s32.totalorder %s32, 0
      %p185 = por %p183, %p184
      %s187 = sadd.s32 %s186, 1
      %p190 = scmp.eq.s32.totalorder %s26, 1
      %p191 = scmp.ne.s32.totalorder %s186, %s188
      %p192 = scmp.eq.s32.totalorder %s26, 0
      %p193 = por %p191, %p192
      %p194 = scmp.ne.s32.totalorder %s186, %s188
      %p195 = scmp.eq.s32.totalorder %s31, 1
      %p196 = por %p194, %p195
      %p197 = scmp.ne.s32.totalorder %s188, %s189
      %p198 = scmp.eq.s32.totalorder %s31, 0
      %p199 = por %p197, %p198
      %p200 = scmp.ne.s32.totalorder %s188, %s189
      %p201 = scmp.eq.s32.totalorder %s32, 1
      %p202 = por %p200, %p201
      %p204 = scmp.ne.s32.totalorder %s189, %s203
      %p205 = scmp.eq.s32.totalorder %s32, 0
      %p206 = por %p204, %p205
      %s208 = sadd.s32 %s207, 1
      %p211 = scmp.eq.s32.totalorder %s26, 1
      %p212 = scmp.ne.s32.totalorder %s207, %s209
      %p213 = scmp.eq.s32.totalorder %s26, 0
      %p214 = por %p212, %p213
      %p215 = scmp.ne.s32.totalorder %s207, %s209
      %p216 = scmp.eq.s32.totalorder %s31, 1
      %p217 = por %p215, %p216
      %p218 = scmp.ne.s32.totalorder %s209, %s210
      %p219 = scmp.eq.s32.totalorder %s31, 0
      %p220 = por %p218, %p219
      %p221 = scmp.ne.s32.totalorder %s209, %s210
      %p222 = scmp.eq.s32.totalorder %s32, 1
      %p223 = por %p221, %p222
      %p225 = scmp.ne.s32.totalorder %s210, %s224
      %p226 = scmp.eq.s32.totalorder %s32, 0
      %p227 = por %p225, %p226
      %s229 = sadd.s32 %s228, 1
      %p232 = scmp.eq.s32.totalorder %s26, 1
      %p233 = scmp.ne.s32.totalorder %s228, %s230
      %p234 = scmp.eq.s32.totalorder %s26, 0
      %p235 = por %p233, %p234
      %p236 = scmp.ne.s32.totalorder %s228, %s230
      %p237 = scmp.eq.s32.totalorder %s31, 1
      %p238 = por %p236, %p237
      %p239 = scmp.ne.s32.totalorder %s230, %s231
      %p240 = scmp.eq.s32.totalorder %s31, 0
      %p241 = por %p239, %p240
      %p242 = scmp.ne.s32.totalorder %s230, %s231
      %p243 = scmp.eq.s32.totalorder %s32, 1
      %p244 = por %p242, %p243
      %p246 = scmp.ne.s32.totalorder %s231, %s245
      %p247 = scmp.eq.s32.totalorder %s32, 0
      %p248 = por %p246, %p247
      %s250 = sadd.s32 %s249, 1
      %p253 = scmp.eq.s32.totalorder %s26, 1
      %p254 = scmp.ne.s32.totalorder %s249, %s251
      %p255 = scmp.eq.s32.totalorder %s26, 0
      %p256 = por %p254, %p255
      %p257 = scmp.ne.s32.totalorder %s249, %s251
      %p258 = scmp.eq.s32.totalorder %s31, 1
      %p259 = por %p257, %p258
      %p260 = scmp.ne.s32.totalorder %s251, %s252
      %p261 = scmp.eq.s32.totalorder %s31, 0
      %p262 = por %p260, %p261
      %p263 = scmp.ne.s32.totalorder %s251, %s252
      %p264 = scmp.eq.s32.totalorder %s32, 1
      %p265 = por %p263, %p264
      %p267 = scmp.ne.s32.totalorder %s252, %s266
      %p268 = scmp.eq.s32.totalorder %s32, 0
      %p269 = por %p267, %p268
      %s271 = sadd.s32 %s270, 1
      %p274 = scmp.eq.s32.totalorder %s26, 1
      %p275 = scmp.ne.s32.totalorder %s270, %s272
      %p276 = scmp.eq.s32.totalorder %s26, 0
      %p277 = por %p275, %p276
      %p278 = scmp.ne.s32.totalorder %s270, %s272
      %p279 = scmp.eq.s32.totalorder %s31, 1
      %p280 = por %p278, %p279
      %p281 = scmp.ne.s32.totalorder %s272, %s273
      %p282 = scmp.eq.s32.totalorder %s31, 0
      %p283 = por %p281, %p282
      %p284 = scmp.ne.s32.totalorder %s272, %s273
      %p285 = scmp.eq.s32.totalorder %s32, 1
      %p286 = por %p284, %p285
      %p288 = scmp.ne.s32.totalorder %s273, %s287
      %p289 = scmp.eq.s32.totalorder %s32, 0
      %p290 = por %p288, %p289
      %s292 = sadd.s32 %s291, 1
      %p295 = scmp.eq.s32.totalorder %s26, 1
      %p296 = scmp.ne.s32.totalorder %s291, %s293
      %p297 = scmp.eq.s32.totalorder %s26, 0
      %p298 = por %p296, %p297
      %p299 = scmp.ne.s32.totalorder %s291, %s293
      %p300 = scmp.eq.s32.totalorder %s31, 1
      %p301 = por %p299, %p300
      %p302 = scmp.ne.s32.totalorder %s293, %s294
      %p303 = scmp.eq.s32.totalorder %s31, 0
      %p304 = por %p302, %p303
      %p305 = scmp.ne.s32.totalorder %s293, %s294
      %p306 = scmp.eq.s32.totalorder %s32, 1
      %p307 = por %p305, %p306
      %p309 = scmp.ne.s32.totalorder %s294, %s308
      %p310 = scmp.eq.s32.totalorder %s32, 0
      %p311 = por %p309, %p310
      %s313 = sadd.s32 %s312, 1
      %p316 = scmp.eq.s32.totalorder %s26, 1
      %p317 = scmp.ne.s32.totalorder %s312, %s314
      %p318 = scmp.eq.s32.totalorder %s26, 0
      %p319 = por %p317, %p318
      %p320 = scmp.ne.s32.totalorder %s312, %s314
      %p321 = scmp.eq.s32.totalorder %s31, 1
      %p322 = por %p320, %p321
      %p323 = scmp.ne.s32.totalorder %s314, %s315
      %p324 = scmp.eq.s32.totalorder %s31, 0
      %p325 = por %p323, %p324
      %p326 = scmp.ne.s32.totalorder %s314, %s315
      %p327 = scmp.eq.s32.totalorder %s32, 1
      %p328 = por %p326, %p327
      %p330 = scmp.ne.s32.totalorder %s315, %s329
      %p331 = scmp.eq.s32.totalorder %s32, 0
      %p332 = por %p330, %p331
      %s334 = sadd.s32 %s333, 1
      %p337 = scmp.eq.s32.totalorder %s26, 1
      %p338 = scmp.ne.s32.totalorder %s333, %s335
      %p339 = scmp.eq.s32.totalorder %s26, 0
      %p340 = por %p338, %p339
      %p341 = scmp.ne.s32.totalorder %s333, %s335
      %p342 = scmp.eq.s32.totalorder %s31, 1
      %p343 = por %p341, %p342
      %p344 = scmp.ne.s32.totalorder %s335, %s336
      %p345 = scmp.eq.s32.totalorder %s31, 0
      %p346 = por %p344, %p345
      %p347 = scmp.ne.s32.totalorder %s335, %s336
      %p348 = scmp.eq.s32.totalorder %s32, 1
      %p349 = por %p347, %p348
      %p351 = scmp.ne.s32.totalorder %s336, %s350
      %p352 = scmp.eq.s32.totalorder %s32, 0
      %p353 = por %p351, %p352
      %s355 = sadd.s32 %s354, 1
      %p358 = scmp.eq.s32.totalorder %s26, 1
      %p359 = scmp.ne.s32.totalorder %s354, %s356
      %p360 = scmp.eq.s32.totalorder %s26, 0
      %p361 = por %p359, %p360
      %p362 = scmp.ne.s32.totalorder %s354, %s356
      %p363 = scmp.eq.s32.totalorder %s31, 1
      %p364 = por %p362, %p363
      %p365 = scmp.ne.s32.totalorder %s356, %s357
      %p366 = scmp.eq.s32.totalorder %s31, 0
      %p367 = por %p365, %p366
      %p368 = scmp.ne.s32.totalorder %s356, %s357
      %p369 = scmp.eq.s32.totalorder %s32, 1
      %p370 = por %p368, %p369
      %p372 = scmp.ne.s32.totalorder %s357, %s371
      %p373 = scmp.eq.s32.totalorder %s32, 0
      %p374 = por %p372, %p373
      %s376 = sadd.s32 %s375, 1
      %p379 = scmp.eq.s32.totalorder %s26, 1
      %p380 = scmp.ne.s32.totalorder %s375, %s377
      %p381 = scmp.eq.s32.totalorder %s26, 0
      %p382 = por %p380, %p381
      %p383 = scmp.ne.s32.totalorder %s375, %s377
      %p384 = scmp.eq.s32.totalorder %s31, 1
      %p385 = por %p383, %p384
      %p386 = scmp.ne.s32.totalorder %s377, %s378
      %p387 = scmp.eq.s32.totalorder %s31, 0
      %p388 = por %p386, %p387
      %p389 = scmp.ne.s32.totalorder %s377, %s378
      %p390 = scmp.eq.s32.totalorder %s32, 1
      %p391 = por %p389, %p390
      %p393 = scmp.ne.s32.totalorder %s378, %s392
      %p394 = scmp.eq.s32.totalorder %s32, 0
      %p395 = por %p393, %p394
      %s396 = ssub.s32 %s26, %s33
      %p397 = scmp.eq.s32.totalorder %s396, 0
      %s399 = sadd.s32 %s398, 1
      %s400 = scalar_select %p397, %s398, %s399
      %p403 = pneg %p397
      %p404 = scmp.eq.s32.totalorder %s26, 1
      %p405 = por %p403, %p404
      %p406 = scmp.ne.s32.totalorder %s398, %s401
      %p407 = scmp.eq.s32.totalorder %s26, 0
      %p408 = por %p406, %p407
      %p409 = scmp.ne.s32.totalorder %s398, %s401
      %p410 = scmp.eq.s32.totalorder %s31, 1
      %p411 = por %p409, %p410
      %p412 = scmp.ne.s32.totalorder %s401, %s402
      %p413 = scmp.eq.s32.totalorder %s31, 0
      %p414 = por %p412, %p413
      %p415 = scmp.ne.s32.totalorder %s401, %s402
      %p416 = scmp.eq.s32.totalorder %s32, 1
      %p417 = por %p415, %p416
      %p419 = scmp.ne.s32.totalorder %s402, %s418
      %p420 = scmp.eq.s32.totalorder %s32, 0
      %p421 = por %p419, %p420
      %p422 = scmp.le.s32.totalorder 1, %s26
      %p423 = scmp.lt.s32.totalorder %s26, 3
      %p424 = pnand %p422, %p423
      %p425 = pneg %p424
      // Predicated region
      $region9: #{efficientnet_gen1vsrest_forward.1} parent=5 // pred_check
        _
      $region10: #{efficientnet_gen1vsrest_forward.1} parent=5 // pred_check_branch
        %427 = sbr.rel (%p424) target = $region12
      $region11: #{efficientnet_gen1vsrest_forward.1} parent=5 // pred_region
        %s428 = ssub.s32 %s26, 1
        // Predicated region
        $region13: #{efficientnet_gen1vsrest_forward.1} parent=11 // pred_check
          %p429 = pneg %p73
        $region14: #{efficientnet_gen1vsrest_forward.1} parent=11 // pred_check_branch
          %431 = sbr.rel (%p429) target = $region16
        $region15: #{efficientnet_gen1vsrest_forward.1} parent=11 // pred_region
          _
        $region16: #{efficientnet_gen1vsrest_forward.1} parent=11 // pred_fallthru
          _
        // Predicated region
        $region17: #{efficientnet_gen1vsrest_forward.1} parent=11 // pred_check
          %p432 = pneg %p94
        $region18: #{efficientnet_gen1vsrest_forward.1} parent=11 // pred_check_branch
          %434 = sbr.rel (%p432) target = $region20
        $region19: #{efficientnet_gen1vsrest_forward.1} parent=11 // pred_region
          _
        $region20: #{efficientnet_gen1vsrest_forward.1} parent=11 // pred_fallthru
          _
        // Predicated region
        $region21: #{efficientnet_gen1vsrest_forward.1} parent=11 // pred_check
          %p435 = pneg %p115
        $region22: #{efficientnet_gen1vsrest_forward.1} parent=11 // pred_check_branch
          %437 = sbr.rel (%p435) target = $region24
        $region23: #{efficientnet_gen1vsrest_forward.1} parent=11 // pred_region
          _
        $region24: #{efficientnet_gen1vsrest_forward.1} parent=11 // pred_fallthru
          _
        // Predicated region
        $region25: #{efficientnet_gen1vsrest_forward.1} parent=11 // pred_check
          %p438 = pneg %p136
        $region26: #{efficientnet_gen1vsrest_forward.1} parent=11 // pred_check_branch
          %440 = sbr.rel (%p438) target = $region28
        $region27: #{efficientnet_gen1vsrest_forward.1} parent=11 // pred_region
          _
        $region28: #{efficientnet_gen1vsrest_forward.1} parent=11 // pred_fallthru
          _
        // Predicated region
        $region29: #{efficientnet_gen1vsrest_forward.1} parent=11 // pred_check
          %p441 = pneg %p157
        $region30: #{efficientnet_gen1vsrest_forward.1} parent=11 // pred_check_branch
          %443 = sbr.rel (%p441) target = $region32
        $region31: #{efficientnet_gen1vsrest_forward.1} parent=11 // pred_region
          _
        $region32: #{efficientnet_gen1vsrest_forward.1} parent=11 // pred_fallthru
          _
        // Predicated region
        $region33: #{efficientnet_gen1vsrest_forward.1} parent=11 // pred_check
          %p444 = pneg %p178
        $region34: #{efficientnet_gen1vsrest_forward.1} parent=11 // pred_check_branch
          %446 = sbr.rel (%p444) target = $region36
        $region35: #{efficientnet_gen1vsrest_forward.1} parent=11 // pred_region
          _
        $region36: #{efficientnet_gen1vsrest_forward.1} parent=11 // pred_fallthru
          _
        // Predicated region
        $region37: #{efficientnet_gen1vsrest_forward.1} parent=11 // pred_check
          %p447 = pneg %p199
        $region38: #{efficientnet_gen1vsrest_forward.1} parent=11 // pred_check_branch
          %449 = sbr.rel (%p447) target = $region40
        $region39: #{efficientnet_gen1vsrest_forward.1} parent=11 // pred_region
          _
        $region40: #{efficientnet_gen1vsrest_forward.1} parent=11 // pred_fallthru
          _
        // Predicated region
        $region41: #{efficientnet_gen1vsrest_forward.1} parent=11 // pred_check
          %p450 = pneg %p220
        $region42: #{efficientnet_gen1vsrest_forward.1} parent=11 // pred_check_branch
          %452 = sbr.rel (%p450) target = $region44
        $region43: #{efficientnet_gen1vsrest_forward.1} parent=11 // pred_region
          _
        $region44: #{efficientnet_gen1vsrest_forward.1} parent=11 // pred_fallthru
          _
        // Predicated region
        $region45: #{efficientnet_gen1vsrest_forward.1} parent=11 // pred_check
          %p453 = pneg %p241
        $region46: #{efficientnet_gen1vsrest_forward.1} parent=11 // pred_check_branch
          %455 = sbr.rel (%p453) target = $region48
        $region47: #{efficientnet_gen1vsrest_forward.1} parent=11 // pred_region
          _
        $region48: #{efficientnet_gen1vsrest_forward.1} parent=11 // pred_fallthru
          _
        // Predicated region
        $region49: #{efficientnet_gen1vsrest_forward.1} parent=11 // pred_check
          %p456 = pneg %p262
        $region50: #{efficientnet_gen1vsrest_forward.1} parent=11 // pred_check_branch
          %458 = sbr.rel (%p456) target = $region52
        $region51: #{efficientnet_gen1vsrest_forward.1} parent=11 // pred_region
          _
        $region52: #{efficientnet_gen1vsrest_forward.1} parent=11 // pred_fallthru
          _
        // Predicated region
        $region53: #{efficientnet_gen1vsrest_forward.1} parent=11 // pred_check
          %p459 = pneg %p283
        $region54: #{efficientnet_gen1vsrest_forward.1} parent=11 // pred_check_branch
          %461 = sbr.rel (%p459) target = $region56
        $region55: #{efficientnet_gen1vsrest_forward.1} parent=11 // pred_region
          _
        $region56: #{efficientnet_gen1vsrest_forward.1} parent=11 // pred_fallthru
          _
        // Predicated region
        $region57: #{efficientnet_gen1vsrest_forward.1} parent=11 // pred_check
          %p462 = pneg %p304
        $region58: #{efficientnet_gen1vsrest_forward.1} parent=11 // pred_check_branch
          %464 = sbr.rel (%p462) target = $region60
        $region59: #{efficientnet_gen1vsrest_forward.1} parent=11 // pred_region
          _
        $region60: #{efficientnet_gen1vsrest_forward.1} parent=11 // pred_fallthru
          _
        // Predicated region
        $region61: #{efficientnet_gen1vsrest_forward.1} parent=11 // pred_check
          %p465 = pneg %p325
        $region62: #{efficientnet_gen1vsrest_forward.1} parent=11 // pred_check_branch
          %467 = sbr.rel (%p465) target = $region64
        $region63: #{efficientnet_gen1vsrest_forward.1} parent=11 // pred_region
          _
        $region64: #{efficientnet_gen1vsrest_forward.1} parent=11 // pred_fallthru
          _
        // Predicated region
        $region65: #{efficientnet_gen1vsrest_forward.1} parent=11 // pred_check
          %p468 = pneg %p346
        $region66: #{efficientnet_gen1vsrest_forward.1} parent=11 // pred_check_branch
          %470 = sbr.rel (%p468) target = $region68
        $region67: #{efficientnet_gen1vsrest_forward.1} parent=11 // pred_region
          _
        $region68: #{efficientnet_gen1vsrest_forward.1} parent=11 // pred_fallthru
          _
        // Predicated region
        $region69: #{efficientnet_gen1vsrest_forward.1} parent=11 // pred_check
          %p471 = pneg %p367
        $region70: #{efficientnet_gen1vsrest_forward.1} parent=11 // pred_check_branch
          %473 = sbr.rel (%p471) target = $region72
        $region71: #{efficientnet_gen1vsrest_forward.1} parent=11 // pred_region
          _
        $region72: #{efficientnet_gen1vsrest_forward.1} parent=11 // pred_fallthru
          _
        // Predicated region
        $region73: #{efficientnet_gen1vsrest_forward.1} parent=11 // pred_check
          %p474 = pneg %p388
        $region74: #{efficientnet_gen1vsrest_forward.1} parent=11 // pred_check_branch
          %476 = sbr.rel (%p474) target = $region76
        $region75: #{efficientnet_gen1vsrest_forward.1} parent=11 // pred_region
          _
        $region76: #{efficientnet_gen1vsrest_forward.1} parent=11 // pred_fallthru
          _
      $region12: #{efficientnet_gen1vsrest_forward.1} parent=5 // pred_fallthru
        _
      %p477 = scmp.lt.s32.totalorder %s26, 2
      // Predicated region
      $region77: #{efficientnet_gen1vsrest_forward.1} parent=5 // pred_check
        %p478 = pneg %p477
      $region78: #{efficientnet_gen1vsrest_forward.1} parent=5 // pred_check_branch
        %480 = sbr.rel (%p478) target = $region80
      $region79: #{efficientnet_gen1vsrest_forward.1} parent=5 // pred_region
        // Predicated region
        $region81: #{efficientnet_gen1vsrest_forward.1} parent=79 // pred_check
          %p481 = pneg %p46
        $region82: #{efficientnet_gen1vsrest_forward.1} parent=79 // pred_check_branch
          %483 = sbr.rel (%p481) target = $region84
        $region83: #{efficientnet_gen1vsrest_forward.1} parent=79 // pred_region
          %p484 = scmp.lt.s32.totalorder %s26, 1
          %s485 = scalar_select %p484, %s26, 1
          %s486 = smul.addr %s485, 72
          %s487 = smul.addr %s486, 8
          %s488 = scalar_lea.vmem %s0, %s487
        $region84: #{efficientnet_gen1vsrest_forward.1} parent=79 // pred_fallthru
          _
      $region80: #{efficientnet_gen1vsrest_forward.1} parent=5 // pred_fallthru
        _
      %p489 = scmp.le.s32.totalorder 1, %s26
      %p490 = scmp.lt.s32.totalorder %s26, 3
      %p491 = pnand %p489, %p490
      %p492 = pneg %p491
      // Predicated region
      $region85: #{efficientnet_gen1vsrest_forward.1} parent=5 // pred_check
        _
      $region86: #{efficientnet_gen1vsrest_forward.1} parent=5 // pred_check_branch
        %494 = sbr.rel (%p491) target = $region88
      $region87: #{efficientnet_gen1vsrest_forward.1} parent=5 // pred_region
        %s495 = ssub.s32 %s26, 1
        %p496 = scmp.lt.s32.totalorder %s31, 1
        %s497 = scalar_select %p496, %s31, 1
        %s498 = smul.addr %s497, 72
        %s499 = smul.addr %s498, 8
        %s500 = scalar_lea.vmem %s0, %s499
        %p501 = pneg %p52
        %p502 = pneg %p49
        %p503 = pneg %p73
        %p504 = pneg %p70
        %p505 = pneg %p94
        %p506 = pneg %p91
        %p507 = pneg %p115
        %p508 = pneg %p112
        %p509 = pneg %p136
        %p510 = pneg %p133
        %p511 = pneg %p157
        %p512 = pneg %p154
        %p513 = pneg %p178
        %p514 = pneg %p175
        %p515 = pneg %p199
        %p516 = pneg %p196
        %p517 = pneg %p220
        %p518 = pneg %p217
        %p519 = pneg %p241
        %p520 = pneg %p238
        %p521 = pneg %p262
        %p522 = pneg %p259
        %p523 = pneg %p283
        %p524 = pneg %p280
        %p525 = pneg %p304
        %p526 = pneg %p301
        %p527 = pneg %p325
        %p528 = pneg %p322
        %p529 = pneg %p346
        %p530 = pneg %p343
        %p531 = pneg %p367
        %p532 = pneg %p364
        %p533 = pneg %p388
        %p534 = pneg %p385
        %p535 = pneg %p414
        %p536 = pneg %p411
        %s537 = sand.u32 %s401, 1
        %s538 = scalar_lea.sflag [#allocation3], %s537
        %s539 = sand.u32 %s401, 1
        %s540 = scalar_lea.vmem [#allocation2], %s539
        %p541 = scmp.lt.s32.totalorder %s31, 1
        %s542 = scalar_select %p541, %s31, 1
        %s543 = smul.addr %s542, 72
        %s544 = smul.addr %s543, 8
        %s545 = scalar_lea.vmem %s0, %s544
        %v547 = vld [vmem:[%s545] sm:$0xff]
        %v548 = vld [vmem:[%s545 + $0x10] sm:$0xff]
        %v549 = vld [vmem:[%s545 + $0x20] sm:$0xff]
        %v550 = vld [vmem:[%s545 + $0x30] sm:$0xff]
        %v551 = vld [vmem:[%s545 + $0x40] sm:$0xff]
        %v552 = vld [vmem:[%s545 + $0x50] sm:$0xff]
        %v553 = vld [vmem:[%s545 + $0x60] sm:$0xff]
        %v554 = vld [vmem:[%s545 + $0x70] sm:$0xff]
        %s555 = scalar_lea.vmem %s545, 144
        %v556 = vld [vmem:[%s555] sm:$0xff]
        %v557 = vld [vmem:[%s555 + $0x10] sm:$0xff]
        %v558 = vld [vmem:[%s555 + $0x20] sm:$0xff]
        %v559 = vld [vmem:[%s555 + $0x30] sm:$0xff]
        %v560 = vld [vmem:[%s555 + $0x40] sm:$0xff]
        %v561 = vld [vmem:[%s555 + $0x50] sm:$0xff]
        %v562 = vld [vmem:[%s555 + $0x60] sm:$0xff]
        %v563 = vld [vmem:[%s555 + $0x70] sm:$0xff]
        %v564 = vld [vmem:[%s545 + $0x1] sm:$0xff]
        %v565 = vld [vmem:[%s545 + $0x11] sm:$0xff]
        %v566 = vld [vmem:[%s545 + $0x21] sm:$0xff]
        %v567 = vld [vmem:[%s545 + $0x31] sm:$0xff]
        %v568 = vld [vmem:[%s545 + $0x41] sm:$0xff]
        %v569 = vld [vmem:[%s545 + $0x51] sm:$0xff]
        %v570 = vld [vmem:[%s545 + $0x61] sm:$0xff]
        %v571 = vld [vmem:[%s545 + $0x71] sm:$0xff]
        %s572 = scalar_lea.vmem %s545, 288
        %v573 = vld [vmem:[%s572] sm:$0xff]
        %v574 = vld [vmem:[%s572 + $0x10] sm:$0xff]
        %v575 = vld [vmem:[%s572 + $0x20] sm:$0xff]
        %v576 = vld [vmem:[%s572 + $0x30] sm:$0xff]
        %v577 = vld [vmem:[%s572 + $0x40] sm:$0xff]
        %v578 = vld [vmem:[%s572 + $0x50] sm:$0xff]
        %v579 = vld [vmem:[%s572 + $0x60] sm:$0xff]
        %v580 = vld [vmem:[%s572 + $0x70] sm:$0xff]
        %s581 = scalar_lea.vmem %s545, 432
        %v582 = vld [vmem:[%s581] sm:$0xff]
        %v583 = vld [vmem:[%s581 + $0x10] sm:$0xff]
        %v584 = vld [vmem:[%s581 + $0x20] sm:$0xff]
        %v585 = vld [vmem:[%s581 + $0x30] sm:$0xff]
        %v586 = vld [vmem:[%s581 + $0x40] sm:$0xff]
        %v587 = vld [vmem:[%s581 + $0x50] sm:$0xff]
        %v588 = vld [vmem:[%s581 + $0x60] sm:$0xff]
        %v589 = vld [vmem:[%s581 + $0x70] sm:$0xff]
        %v590 = vld [vmem:[%s572 + $0x1] sm:$0xff]
        %v591 = vld [vmem:[%s572 + $0x11] sm:$0xff]
        %v592 = vld [vmem:[%s572 + $0x21] sm:$0xff]
        %v593 = vld [vmem:[%s572 + $0x31] sm:$0xff]
        %v594 = vld [vmem:[%s572 + $0x41] sm:$0xff]
        %v595 = vld [vmem:[%s572 + $0x51] sm:$0xff]
        %v596 = vld [vmem:[%s572 + $0x61] sm:$0xff]
        %v597 = vld [vmem:[%s572 + $0x71] sm:$0xff]
        %s598 = scalar_lea.vmem %s545, 16
        %v599 = vld [vmem:[%s598] sm:$0xff]
        %v600 = vld [vmem:[%s598 + $0x10] sm:$0xff]
        %v601 = vld [vmem:[%s598 + $0x20] sm:$0xff]
        %v602 = vld [vmem:[%s598 + $0x30] sm:$0xff]
        %v603 = vld [vmem:[%s598 + $0x40] sm:$0xff]
        %v604 = vld [vmem:[%s598 + $0x50] sm:$0xff]
        %v605 = vld [vmem:[%s598 + $0x60] sm:$0xff]
        %v606 = vld [vmem:[%s598 + $0x70] sm:$0xff]
        %s607 = scalar_lea.vmem %s545, 160
        %v608 = vld [vmem:[%s607] sm:$0xff]
        %v609 = vld [vmem:[%s607 + $0x10] sm:$0xff]
        %v610 = vld [vmem:[%s607 + $0x20] sm:$0xff]
        %v611 = vld [vmem:[%s607 + $0x30] sm:$0xff]
        %v612 = vld [vmem:[%s607 + $0x40] sm:$0xff]
        %v613 = vld [vmem:[%s607 + $0x50] sm:$0xff]
        %v614 = vld [vmem:[%s607 + $0x60] sm:$0xff]
        %v615 = vld [vmem:[%s607 + $0x70] sm:$0xff]
        %v616 = vld [vmem:[%s598 + $0x1] sm:$0xff]
        %v617 = vld [vmem:[%s598 + $0x11] sm:$0xff]
        %v618 = vld [vmem:[%s598 + $0x21] sm:$0xff]
        %v619 = vld [vmem:[%s598 + $0x31] sm:$0xff]
        %v620 = vld [vmem:[%s598 + $0x41] sm:$0xff]
        %v621 = vld [vmem:[%s598 + $0x51] sm:$0xff]
        %v622 = vld [vmem:[%s598 + $0x61] sm:$0xff]
        %v623 = vld [vmem:[%s598 + $0x71] sm:$0xff]
        %632 = vrot.lane.b32.xlu0 %v556, 4
        %v633 = vpop.permute.xlu0 %632
        %634 = vrot.lane.b32.xlu0 %v557, 4
        %v635 = vpop.permute.xlu0 %634
        %636 = vrot.lane.b32.xlu0 %v558, 4
        %v637 = vpop.permute.xlu0 %636
        %638 = vrot.lane.b32.xlu0 %v559, 4
        %v639 = vpop.permute.xlu0 %638
        %640 = vrot.lane.b32.xlu0 %v560, 4
        %v641 = vpop.permute.xlu0 %640
        %642 = vrot.lane.b32.xlu0 %v561, 4
        %v643 = vpop.permute.xlu0 %642
        %644 = vrot.lane.b32.xlu0 %v562, 4
        %v645 = vpop.permute.xlu0 %644
        %646 = vrot.lane.b32.xlu0 %v563, 4
        %v647 = vpop.permute.xlu0 %646
        %664 = vrot.lane.b32.xlu0 %v564, 8
        %v665 = vpop.permute.xlu0 %664
        %666 = vrot.lane.b32.xlu0 %v565, 8
        %v667 = vpop.permute.xlu0 %666
        %668 = vrot.lane.b32.xlu0 %v566, 8
        %v669 = vpop.permute.xlu0 %668
        %670 = vrot.lane.b32.xlu0 %v567, 8
        %v671 = vpop.permute.xlu0 %670
        %672 = vrot.lane.b32.xlu0 %v568, 8
        %v673 = vpop.permute.xlu0 %672
        %674 = vrot.lane.b32.xlu0 %v569, 8
        %v675 = vpop.permute.xlu0 %674
        %676 = vrot.lane.b32.xlu0 %v570, 8
        %v677 = vpop.permute.xlu0 %676
        %678 = vrot.lane.b32.xlu0 %v571, 8
        %v679 = vpop.permute.xlu0 %678
        %696 = vrot.lane.b32.xlu0 %v573, 12
        %v697 = vpop.permute.xlu0 %696
        %698 = vrot.lane.b32.xlu0 %v574, 12
        %v699 = vpop.permute.xlu0 %698
        %700 = vrot.lane.b32.xlu0 %v575, 12
        %v701 = vpop.permute.xlu0 %700
        %702 = vrot.lane.b32.xlu0 %v576, 12
        %v703 = vpop.permute.xlu0 %702
        %704 = vrot.lane.b32.xlu0 %v577, 12
        %v705 = vpop.permute.xlu0 %704
        %706 = vrot.lane.b32.xlu0 %v578, 12
        %v707 = vpop.permute.xlu0 %706
        %708 = vrot.lane.b32.xlu0 %v579, 12
        %v709 = vpop.permute.xlu0 %708
        %710 = vrot.lane.b32.xlu0 %v580, 12
        %v711 = vpop.permute.xlu0 %710
        %728 = vrot.lane.b32.xlu0 %v582, 16
        %v729 = vpop.permute.xlu0 %728
        %730 = vrot.lane.b32.xlu0 %v583, 16
        %v731 = vpop.permute.xlu0 %730
        %732 = vrot.lane.b32.xlu0 %v584, 16
        %v733 = vpop.permute.xlu0 %732
        %734 = vrot.lane.b32.xlu0 %v585, 16
        %v735 = vpop.permute.xlu0 %734
        %736 = vrot.lane.b32.xlu0 %v586, 16
        %v737 = vpop.permute.xlu0 %736
        %738 = vrot.lane.b32.xlu0 %v587, 16
        %v739 = vpop.permute.xlu0 %738
        %740 = vrot.lane.b32.xlu0 %v588, 16
        %v741 = vpop.permute.xlu0 %740
        %742 = vrot.lane.b32.xlu0 %v589, 16
        %v743 = vpop.permute.xlu0 %742
        %760 = vrot.lane.b32.xlu0 %v590, 20
        %v761 = vpop.permute.xlu0 %760
        %762 = vrot.lane.b32.xlu0 %v591, 20
        %v763 = vpop.permute.xlu0 %762
        %764 = vrot.lane.b32.xlu0 %v592, 20
        %v765 = vpop.permute.xlu0 %764
        %766 = vrot.lane.b32.xlu0 %v593, 20
        %v767 = vpop.permute.xlu0 %766
        %768 = vrot.lane.b32.xlu0 %v594, 20
        %v769 = vpop.permute.xlu0 %768
        %770 = vrot.lane.b32.xlu0 %v595, 20
        %v771 = vpop.permute.xlu0 %770
        %772 = vrot.lane.b32.xlu0 %v596, 20
        %v773 = vpop.permute.xlu0 %772
        %774 = vrot.lane.b32.xlu0 %v597, 20
        %v775 = vpop.permute.xlu0 %774
        %792 = vrot.lane.b32.xlu0 %v599, 24
        %v793 = vpop.permute.xlu0 %792
        %794 = vrot.lane.b32.xlu0 %v600, 24
        %v795 = vpop.permute.xlu0 %794
        %796 = vrot.lane.b32.xlu0 %v601, 24
        %v797 = vpop.permute.xlu0 %796
        %798 = vrot.lane.b32.xlu0 %v602, 24
        %v799 = vpop.permute.xlu0 %798
        %800 = vrot.lane.b32.xlu0 %v603, 24
        %v801 = vpop.permute.xlu0 %800
        %802 = vrot.lane.b32.xlu0 %v604, 24
        %v803 = vpop.permute.xlu0 %802
        %804 = vrot.lane.b32.xlu0 %v605, 24
        %v805 = vpop.permute.xlu0 %804
        %806 = vrot.lane.b32.xlu0 %v606, 24
        %v807 = vpop.permute.xlu0 %806
        %824 = vrot.lane.b32.xlu0 %v608, 28
        %v825 = vpop.permute.xlu0 %824
        %826 = vrot.lane.b32.xlu0 %v609, 28
        %v827 = vpop.permute.xlu0 %826
        %828 = vrot.lane.b32.xlu0 %v610, 28
        %v829 = vpop.permute.xlu0 %828
        %830 = vrot.lane.b32.xlu0 %v611, 28
        %v831 = vpop.permute.xlu0 %830
        %832 = vrot.lane.b32.xlu0 %v612, 28
        %v833 = vpop.permute.xlu0 %832
        %834 = vrot.lane.b32.xlu0 %v613, 28
        %v835 = vpop.permute.xlu0 %834
        %836 = vrot.lane.b32.xlu0 %v614, 28
        %v837 = vpop.permute.xlu0 %836
        %838 = vrot.lane.b32.xlu0 %v615, 28
        %v839 = vpop.permute.xlu0 %838
        %856 = vrot.lane.b32.xlu0 %v616, 32
        %v857 = vpop.permute.xlu0 %856
        %858 = vrot.lane.b32.xlu0 %v617, 32
        %v859 = vpop.permute.xlu0 %858
        %860 = vrot.lane.b32.xlu0 %v618, 32
        %v861 = vpop.permute.xlu0 %860
        %862 = vrot.lane.b32.xlu0 %v619, 32
        %v863 = vpop.permute.xlu0 %862
        %864 = vrot.lane.b32.xlu0 %v620, 32
        %v865 = vpop.permute.xlu0 %864
        %866 = vrot.lane.b32.xlu0 %v621, 32
        %v867 = vpop.permute.xlu0 %866
        %868 = vrot.lane.b32.xlu0 %v622, 32
        %v869 = vpop.permute.xlu0 %868
        %870 = vrot.lane.b32.xlu0 %v623, 32
        %v871 = vpop.permute.xlu0 %870
        %vm880 = vcmask 31744
        %v881 = vsel %vm880, %v547, %v633
        %v882 = vsel %vm880, %v548, %v635
        %v883 = vsel %vm880, %v549, %v637
        %v884 = vsel %vm880, %v550, %v639
        %v885 = vsel %vm880, %v551, %v641
        %v886 = vsel %vm880, %v552, %v643
        %v887 = vsel %vm880, %v553, %v645
        %v888 = vsel %vm880, %v554, %v647
        %vm889 = vcmask 64512
        %v890 = vsel %vm889, %v881, %v665
        %v891 = vsel %vm889, %v882, %v667
        %v892 = vsel %vm889, %v883, %v669
        %v893 = vsel %vm889, %v884, %v671
        %v894 = vsel %vm889, %v885, %v673
        %v895 = vsel %vm889, %v886, %v675
        %v896 = vsel %vm889, %v887, %v677
        %v897 = vsel %vm889, %v888, %v679
        %vm898 = vcmask 97280
        %v899 = vsel %vm898, %v890, %v697
        %v900 = vsel %vm898, %v891, %v699
        %v901 = vsel %vm898, %v892, %v701
        %v902 = vsel %vm898, %v893, %v703
        %v903 = vsel %vm898, %v894, %v705
        %v904 = vsel %vm898, %v895, %v707
        %v905 = vsel %vm898, %v896, %v709
        %v906 = vsel %vm898, %v897, %v711
        %vm907 = vcmask 130048
        %v908 = vsel %vm907, %v899, %v729
        %v909 = vsel %vm907, %v900, %v731
        %v910 = vsel %vm907, %v901, %v733
        %v911 = vsel %vm907, %v902, %v735
        %v912 = vsel %vm907, %v903, %v737
        %v913 = vsel %vm907, %v904, %v739
        %v914 = vsel %vm907, %v905, %v741
        %v915 = vsel %vm907, %v906, %v743
        %vm916 = vcmask 162816
        %v917 = vsel %vm916, %v908, %v761
        %v918 = vsel %vm916, %v909, %v763
        %v919 = vsel %vm916, %v910, %v765
        %v920 = vsel %vm916, %v911, %v767
        %v921 = vsel %vm916, %v912, %v769
        %v922 = vsel %vm916, %v913, %v771
        %v923 = vsel %vm916, %v914, %v773
        %v924 = vsel %vm916, %v915, %v775
        %vm925 = vcmask 195584
        %v926 = vsel %vm925, %v917, %v793
        %v927 = vsel %vm925, %v918, %v795
        %v928 = vsel %vm925, %v919, %v797
        %v929 = vsel %vm925, %v920, %v799
        %v930 = vsel %vm925, %v921, %v801
        %v931 = vsel %vm925, %v922, %v803
        %v932 = vsel %vm925, %v923, %v805
        %v933 = vsel %vm925, %v924, %v807
        %vm934 = vcmask 228352
        %v935 = vsel %vm934, %v926, %v825
        %v936 = vsel %vm934, %v927, %v827
        %v937 = vsel %vm934, %v928, %v829
        %v938 = vsel %vm934, %v929, %v831
        %v939 = vsel %vm934, %v930, %v833
        %v940 = vsel %vm934, %v931, %v835
        %v941 = vsel %vm934, %v932, %v837
        %v942 = vsel %vm934, %v933, %v839
        %vm943 = vcmask 261120
        %v944 = vsel %vm943, %v935, %v857
        %v945 = vsel %vm943, %v936, %v859
        %v946 = vsel %vm943, %v937, %v861
        %v947 = vsel %vm943, %v938, %v863
        %v948 = vsel %vm943, %v939, %v865
        %v949 = vsel %vm943, %v940, %v867
        %v950 = vsel %vm943, %v941, %v869
        %v951 = vsel %vm943, %v942, %v871
        %v952 = vpack.c.bf16 %v945, %v944
        %v953 = vpack.c.bf16 %v947, %v946
        %v954 = vpack.c.bf16 %v949, %v948
        %v955 = vpack.c.bf16 %v951, %v950
        %v956 = vld [vmem:[%s1] sm:$0xf]
        %v957 = vld [vmem:[%s1 + $0x4] sm:$0xf]
        %v958 = vld [vmem:[%s1 + $0x8] sm:$0xf]
        %v959 = vld [vmem:[%s1 + $0xc] sm:$0xf]
        %v960 = vld [vmem:[%s1 + $0x10] sm:$0x3]
        %v961 = vld [vmem:[%s2] sm:$0x1]
        %v963 = vperm.slane %v961, 0
        %v970 = vunpack.c.l.b16 %v956
        %v971 = vunpack.c.l.b16 %v957
        %v972 = vunpack.c.l.b16 %v958
        %v973 = vunpack.c.l.b16 %v959
        %v974 = vunpack.c.l.b16 %v960
        %v975 = vpack.c.b16 %v971, %v970
        %v976 = vpack.c.b16 %v973, %v972
        %v977 = vpack.c.b16 %v974, %v974
        %vm980 = vcmask 293888
        %v982 = vsel %vm980, %v952, 0
        %v985 = vsel %vm980, %v953, 0
        %v988 = vsel %vm980, %v954, 0
        %v991 = vsel %vm980, %v955, 0
        %vm993 = vcmask 1041408
        %v995 = vsel %vm993, %v977, 0
        %997 = vmatpush.bf16.msra.mxu0 0
        %998 = vmatpush.bf16.msra.mxu0 0
        %999 = vmatpush.bf16.msra.mxu0 0
        %1000 = vmatpush.bf16.msra.mxu0 0
        %1001 = vmatpush.bf16.msra.mxu0 0
        %1002 = vmatpush.bf16.msra.mxu0 %v995
        %1003 = vmatpush.bf16.msra.mxu0 %v976
        %1004 = vmatpush.bf16.msra.mxu0 %v975
        %1005 = vmatmul.bf16.gmra.mxu0 %v982
        %v1006 = vpop.f32.mrf.mxu0
        %v1007 = vadd.f32 %v963, %v1006
        %v1008 = vpop.f32.mrf.mxu0
        %v1009 = vadd.f32 %v963, %v1008
        %1010 = vmatmul.bf16.gmra.mxu0 %v985
        %v1011 = vpop.f32.mrf.mxu0
        %v1012 = vadd.f32 %v963, %v1011
        %v1013 = vpop.f32.mrf.mxu0
        %v1014 = vadd.f32 %v963, %v1013
        %1015 = vmatmul.bf16.gmra.mxu0 %v988
        %v1016 = vpop.f32.mrf.mxu0
        %v1017 = vadd.f32 %v963, %v1016
        %v1018 = vpop.f32.mrf.mxu0
        %v1019 = vadd.f32 %v963, %v1018
        %1020 = vmatmul.bf16.gmra.mxu0 %v991
        %v1021 = vpop.f32.mrf.mxu0
        %v1022 = vadd.f32 %v963, %v1021
        %v1023 = vpop.f32.mrf.mxu0
        %v1024 = vadd.f32 %v963, %v1023
        %1025 = vdwg.mxu0
        %v1026 = vsub.f32 0.0, %v1007
        %v1027 = vsub.f32 0.0, %v1009
        %v1028 = vsub.f32 0.0, %v1012
        %v1029 = vsub.f32 0.0, %v1014
        %v1030 = vsub.f32 0.0, %v1017
        %v1031 = vsub.f32 0.0, %v1019
        %v1032 = vsub.f32 0.0, %v1022
        %v1033 = vsub.f32 0.0, %v1024
        %v1034 = vmul.f32 %v1026, 1.442695
        %v1035 = vpow.pop %v1034
        %v1036 = vmul.f32 %v1027, 1.442695
        %v1037 = vpow.pop %v1036
        %v1038 = vmul.f32 %v1028, 1.442695
        %v1039 = vpow.pop %v1038
        %v1040 = vmul.f32 %v1029, 1.442695
        %v1041 = vpow.pop %v1040
        %v1042 = vmul.f32 %v1030, 1.442695
        %v1043 = vpow.pop %v1042
        %v1044 = vmul.f32 %v1031, 1.442695
        %v1045 = vpow.pop %v1044
        %v1046 = vmul.f32 %v1032, 1.442695
        %v1047 = vpow.pop %v1046
        %v1048 = vmul.f32 %v1033, 1.442695
        %v1049 = vpow.pop %v1048
        %v1050 = vadd.f32 %v1035, 1.0
        %v1051 = vadd.f32 %v1037, 1.0
        %v1052 = vadd.f32 %v1039, 1.0
        %v1053 = vadd.f32 %v1041, 1.0
        %v1054 = vadd.f32 %v1043, 1.0
        %v1055 = vadd.f32 %v1045, 1.0
        %v1056 = vadd.f32 %v1047, 1.0
        %v1057 = vadd.f32 %v1049, 1.0
        %v1058 = vrcp.pop %v1050
        %v1059 = vrcp.pop %v1051
        %v1060 = vrcp.pop %v1052
        %v1061 = vrcp.pop %v1053
        %v1062 = vrcp.pop %v1054
        %v1063 = vrcp.pop %v1055
        %v1064 = vrcp.pop %v1056
        %v1065 = vrcp.pop %v1057
        %v1066 = vmul.f32 %v1007, %v1058
        %v1067 = vmul.f32 %v1009, %v1059
        %v1068 = vmul.f32 %v1012, %v1060
        %v1069 = vmul.f32 %v1014, %v1061
        %v1070 = vmul.f32 %v1017, %v1062
        %v1071 = vmul.f32 %v1019, %v1063
        %v1072 = vmul.f32 %v1022, %v1064
        %v1073 = vmul.f32 %v1024, %v1065
        %v1074 = vpack.c.bf16 %v1067, %v1066
        %v1075 = vpack.c.bf16 %v1069, %v1068
        %v1076 = vpack.c.bf16 %v1071, %v1070
        %v1077 = vpack.c.bf16 %v1073, %v1072
        %v1078 = vld [vmem:[%s3] sm:$0xf]
        %v1079 = vld [vmem:[%s4] sm:$0x1]
        %v1081 = vperm.slane %v1079, 0
        %v1084 = vsel %vm889, %v1074, 0
        %v1087 = vsel %vm889, %v1075, 0
        %v1090 = vsel %vm889, %v1076, 0
        %v1093 = vsel %vm889, %v1077, 0
        %vm1095 = vcmask 1043456
        %v1097 = vsel %vm1095, %v1078, 0
        %1099 = vmatpush.bf16.msra.mxu0 0
        %1100 = vmatpush.bf16.msra.mxu0 0
        %1101 = vmatpush.bf16.msra.mxu0 0
        %1102 = vmatpush.bf16.msra.mxu0 0
        %1103 = vmatpush.bf16.msra.mxu0 0
        %1104 = vmatpush.bf16.msra.mxu0 0
        %1105 = vmatpush.bf16.msra.mxu0 0
        %1106 = vmatpush.bf16.msra.mxu0 %v1097
        %1107 = vmatmul.bf16.gmra.mxu0 %v1084
        %v1108 = vpop.f32.mrf.mxu0
        %v1109 = vadd.f32 %v1081, %v1108
        %v1110 = vpop.f32.mrf.mxu0
        %v1111 = vadd.f32 %v1081, %v1110
        %1112 = vmatmul.bf16.gmra.mxu0 %v1087
        %v1113 = vpop.f32.mrf.mxu0
        %v1114 = vadd.f32 %v1081, %v1113
        %v1115 = vpop.f32.mrf.mxu0
        %v1116 = vadd.f32 %v1081, %v1115
        %1117 = vmatmul.bf16.gmra.mxu0 %v1090
        %v1118 = vpop.f32.mrf.mxu0
        %v1119 = vadd.f32 %v1081, %v1118
        %v1120 = vpop.f32.mrf.mxu0
        %v1121 = vadd.f32 %v1081, %v1120
        %1122 = vmatmul.bf16.gmra.mxu0 %v1093
        %v1123 = vpop.f32.mrf.mxu0
        %v1124 = vadd.f32 %v1081, %v1123
        %v1125 = vpop.f32.mrf.mxu0
        %v1126 = vadd.f32 %v1081, %v1125
        %1127 = vdwg.mxu0
        %v1128 = vsub.f32 0.0, %v1109
        %v1129 = vsub.f32 0.0, %v1111
        %v1130 = vsub.f32 0.0, %v1114
        %v1131 = vsub.f32 0.0, %v1116
        %v1132 = vsub.f32 0.0, %v1119
        %v1133 = vsub.f32 0.0, %v1121
        %v1134 = vsub.f32 0.0, %v1124
        %v1135 = vsub.f32 0.0, %v1126
        %v1136 = vmul.f32 %v1128, 1.442695
        %v1137 = vpow.pop %v1136
        %v1138 = vmul.f32 %v1129, 1.442695
        %v1139 = vpow.pop %v1138
        %v1140 = vmul.f32 %v1130, 1.442695
        %v1141 = vpow.pop %v1140
        %v1142 = vmul.f32 %v1131, 1.442695
        %v1143 = vpow.pop %v1142
        %v1144 = vmul.f32 %v1132, 1.442695
        %v1145 = vpow.pop %v1144
        %v1146 = vmul.f32 %v1133, 1.442695
        %v1147 = vpow.pop %v1146
        %v1148 = vmul.f32 %v1134, 1.442695
        %v1149 = vpow.pop %v1148
        %v1150 = vmul.f32 %v1135, 1.442695
        %v1151 = vpow.pop %v1150
        %v1152 = vadd.f32 %v1137, 1.0
        %v1153 = vadd.f32 %v1139, 1.0
        %v1154 = vadd.f32 %v1141, 1.0
        %v1155 = vadd.f32 %v1143, 1.0
        %v1156 = vadd.f32 %v1145, 1.0
        %v1157 = vadd.f32 %v1147, 1.0
        %v1158 = vadd.f32 %v1149, 1.0
        %v1159 = vadd.f32 %v1151, 1.0
        %v1160 = vrcp.pop %v1152
        %v1161 = vrcp.pop %v1153
        %v1162 = vrcp.pop %v1154
        %v1163 = vrcp.pop %v1155
        %v1164 = vrcp.pop %v1156
        %v1165 = vrcp.pop %v1157
        %v1166 = vrcp.pop %v1158
        %v1167 = vrcp.pop %v1159
        %v1168 = vmul.f32 %v1109, %v1160
        %v1169 = vmul.f32 %v1111, %v1161
        %v1170 = vmul.f32 %v1114, %v1162
        %v1171 = vmul.f32 %v1116, %v1163
        %v1172 = vmul.f32 %v1119, %v1164
        %v1173 = vmul.f32 %v1121, %v1165
        %v1174 = vmul.f32 %v1124, %v1166
        %v1175 = vmul.f32 %v1126, %v1167
        %v1176 = vlaneseq
        %v1177 = vshrl.u32 %v1176, 7
        %v1178 = vadd.s32 %v1177, 8
        %v1179 = vadd.s32 %v1177, 16
        %v1180 = vadd.s32 %v1177, 24
        %v1181 = vadd.s32 %v1177, 32
        %v1182 = vadd.s32 %v1177, 40
        %v1183 = vadd.s32 %v1177, 48
        %v1184 = vadd.s32 %v1177, 56
        %vm1185 = vcmp.lt.s32.totalorder %v1177, 0
        %v1186 = vsub.s32 0, %v1177
        %v1187 = vsel %vm1185, %v1186, %v1177
        %v1188 = vshrl.u32 %v1187, 3
        %v1189 = vand.u32 %v1187, 7
        %v1190 = vsub.s32 0, %v1189
        %v1191 = vsel %vm1185, %v1190, %v1189
        %vm1192 = vcmp.lt.s32.totalorder %v1178, 0
        %v1193 = vsub.s32 0, %v1178
        %v1194 = vsel %vm1192, %v1193, %v1178
        %v1195 = vshrl.u32 %v1194, 3
        %v1196 = vand.u32 %v1194, 7
        %v1197 = vsub.s32 0, %v1196
        %v1198 = vsel %vm1192, %v1197, %v1196
        %vm1199 = vcmp.lt.s32.totalorder %v1179, 0
        %v1200 = vsub.s32 0, %v1179
        %v1201 = vsel %vm1199, %v1200, %v1179
        %v1202 = vshrl.u32 %v1201, 3
        %v1203 = vand.u32 %v1201, 7
        %v1204 = vsub.s32 0, %v1203
        %v1205 = vsel %vm1199, %v1204, %v1203
        %vm1206 = vcmp.lt.s32.totalorder %v1180, 0
        %v1207 = vsub.s32 0, %v1180
        %v1208 = vsel %vm1206, %v1207, %v1180
        %v1209 = vshrl.u32 %v1208, 3
        %v1210 = vand.u32 %v1208, 7
        %v1211 = vsub.s32 0, %v1210
        %v1212 = vsel %vm1206, %v1211, %v1210
        %vm1213 = vcmp.lt.s32.totalorder %v1181, 0
        %v1214 = vsub.s32 0, %v1181
        %v1215 = vsel %vm1213, %v1214, %v1181
        %v1216 = vshrl.u32 %v1215, 3
        %v1217 = vand.u32 %v1215, 7
        %v1218 = vsub.s32 0, %v1217
        %v1219 = vsel %vm1213, %v1218, %v1217
        %vm1220 = vcmp.lt.s32.totalorder %v1182, 0
        %v1221 = vsub.s32 0, %v1182
        %v1222 = vsel %vm1220, %v1221, %v1182
        %v1223 = vshrl.u32 %v1222, 3
        %v1224 = vand.u32 %v1222, 7
        %v1225 = vsub.s32 0, %v1224
        %v1226 = vsel %vm1220, %v1225, %v1224
        %vm1227 = vcmp.lt.s32.totalorder %v1183, 0
        %v1228 = vsub.s32 0, %v1183
        %v1229 = vsel %vm1227, %v1228, %v1183
        %v1230 = vshrl.u32 %v1229, 3
        %v1231 = vand.u32 %v1229, 7
        %v1232 = vsub.s32 0, %v1231
        %v1233 = vsel %vm1227, %v1232, %v1231
        %vm1234 = vcmp.lt.s32.totalorder %v1184, 0
        %v1235 = vsub.s32 0, %v1184
        %v1236 = vsel %vm1234, %v1235, %v1184
        %v1237 = vshrl.u32 %v1236, 3
        %v1238 = vand.u32 %v1236, 7
        %v1239 = vsub.s32 0, %v1238
        %v1240 = vsel %vm1234, %v1239, %v1238
        %vm1241 = vcmp.ne.s32.totalorder %v1191, 0
        %vm1242 = vcmp.ne.s32.totalorder %v1198, 0
        %vm1243 = vcmp.ne.s32.totalorder %v1205, 0
        %vm1244 = vcmp.ne.s32.totalorder %v1212, 0
        %vm1245 = vcmp.ne.s32.totalorder %v1219, 0
        %vm1246 = vcmp.ne.s32.totalorder %v1226, 0
        %vm1247 = vcmp.ne.s32.totalorder %v1233, 0
        %vm1248 = vcmp.ne.s32.totalorder %v1240, 0
        %vm1249 = vcmp.lt.s32.totalorder %v1191, 0
        %vm1250 = vcmp.lt.s32.totalorder %v1198, 0
        %vm1251 = vcmp.lt.s32.totalorder %v1205, 0
        %vm1252 = vcmp.lt.s32.totalorder %v1212, 0
        %vm1253 = vcmp.lt.s32.totalorder %v1219, 0
        %vm1254 = vcmp.lt.s32.totalorder %v1226, 0
        %vm1255 = vcmp.lt.s32.totalorder %v1233, 0
        %vm1256 = vcmp.lt.s32.totalorder %v1240, 0
        %vm1257 = vmand %vm1249, %vm1241
        %vm1258 = vmand %vm1250, %vm1242
        %vm1259 = vmand %vm1251, %vm1243
        %vm1260 = vmand %vm1252, %vm1244
        %vm1261 = vmand %vm1253, %vm1245
        %vm1262 = vmand %vm1254, %vm1246
        %vm1263 = vmand %vm1255, %vm1247
        %vm1264 = vmand %vm1256, %vm1248
        %v1265 = vadd.s32 %v1191, 8
        %v1266 = vadd.s32 %v1198, 8
        %v1267 = vadd.s32 %v1205, 8
        %v1268 = vadd.s32 %v1212, 8
        %v1269 = vadd.s32 %v1219, 8
        %v1270 = vadd.s32 %v1226, 8
        %v1271 = vadd.s32 %v1233, 8
        %v1272 = vadd.s32 %v1240, 8
        %v1273 = vsel %vm1257, %v1265, %v1191
        %v1274 = vsel %vm1258, %v1266, %v1198
        %v1275 = vsel %vm1259, %v1267, %v1205
        %v1276 = vsel %vm1260, %v1268, %v1212
        %v1277 = vsel %vm1261, %v1269, %v1219
        %v1278 = vsel %vm1262, %v1270, %v1226
        %v1279 = vsel %vm1263, %v1271, %v1233
        %v1280 = vsel %vm1264, %v1272, %v1240
        %vm1281 = vcmp.ne.s32.totalorder %v1273, 0
        %vm1282 = vcmp.ne.s32.totalorder %v1274, 0
        %vm1283 = vcmp.ne.s32.totalorder %v1275, 0
        %vm1284 = vcmp.ne.s32.totalorder %v1276, 0
        %vm1285 = vcmp.ne.s32.totalorder %v1277, 0
        %vm1286 = vcmp.ne.s32.totalorder %v1278, 0
        %vm1287 = vcmp.ne.s32.totalorder %v1279, 0
        %vm1288 = vcmp.ne.s32.totalorder %v1280, 0
        %vm1289 = vcmp.ne.s32.totalorder %v1273, 7
        %vm1290 = vcmp.ne.s32.totalorder %v1274, 7
        %vm1291 = vcmp.ne.s32.totalorder %v1275, 7
        %vm1292 = vcmp.ne.s32.totalorder %v1276, 7
        %vm1293 = vcmp.ne.s32.totalorder %v1277, 7
        %vm1294 = vcmp.ne.s32.totalorder %v1278, 7
        %vm1295 = vcmp.ne.s32.totalorder %v1279, 7
        %vm1296 = vcmp.ne.s32.totalorder %v1280, 7
        %vm1297 = vcmp.ge.s32.totalorder %v1177, 8
        %vm1298 = vcmp.ge.s32.totalorder %v1178, 8
        %vm1299 = vcmp.ge.s32.totalorder %v1179, 8
        %vm1300 = vcmp.ge.s32.totalorder %v1180, 8
        %vm1301 = vcmp.ge.s32.totalorder %v1181, 8
        %vm1302 = vcmp.ge.s32.totalorder %v1182, 8
        %vm1303 = vcmp.ge.s32.totalorder %v1183, 8
        %vm1304 = vcmp.ge.s32.totalorder %v1184, 8
        %vm1305 = vcmp.lt.s32.totalorder %v1177, 56
        %vm1306 = vcmp.lt.s32.totalorder %v1178, 56
        %vm1307 = vcmp.lt.s32.totalorder %v1179, 56
        %vm1308 = vcmp.lt.s32.totalorder %v1180, 56
        %vm1309 = vcmp.lt.s32.totalorder %v1181, 56
        %vm1310 = vcmp.lt.s32.totalorder %v1182, 56
        %vm1311 = vcmp.lt.s32.totalorder %v1183, 56
        %vm1312 = vcmp.lt.s32.totalorder %v1184, 56
        %v1313 = vrot.slane %v1168, 7
        %v1314 = vrot.slane %v1169, 7
        %v1315 = vrot.slane %v1170, 7
        %v1316 = vrot.slane %v1171, 7
        %v1317 = vrot.slane %v1172, 7
        %v1318 = vrot.slane %v1173, 7
        %v1319 = vrot.slane %v1174, 7
        %v1320 = vrot.slane %v1175, 7
        %vm1321 = vcmp.lt.s32.totalorder %v1177, 1
        %v1322 = vsel %vm1321, %v1319, %v1320
        %v1323 = vsel %vm1321, %v1318, %v1319
        %v1324 = vsel %vm1321, %v1317, %v1318
        %v1325 = vsel %vm1321, %v1316, %v1317
        %v1326 = vsel %vm1321, %v1315, %v1316
        %v1327 = vsel %vm1321, %v1314, %v1315
        %v1328 = vsel %vm1321, %v1313, %v1314
        %v1329 = vsel %vm1321, %v1320, %v1313
        %v1330 = vsel %vm1281, 1, 0
        %v1331 = vsel %vm1282, 1, 0
        %v1332 = vsel %vm1283, 1, 0
        %v1333 = vsel %vm1284, 1, 0
        %v1334 = vsel %vm1285, 1, 0
        %v1335 = vsel %vm1286, 1, 0
        %v1336 = vsel %vm1287, 1, 0
        %v1337 = vsel %vm1288, 1, 0
        %vm1338 = vcmp.eq.s32.totalorder %v1330, 1
        %vm1339 = vcmp.eq.s32.totalorder %v1331, 1
        %vm1340 = vcmp.eq.s32.totalorder %v1332, 1
        %vm1341 = vcmp.eq.s32.totalorder %v1333, 1
        %vm1342 = vcmp.eq.s32.totalorder %v1334, 1
        %vm1343 = vcmp.eq.s32.totalorder %v1335, 1
        %vm1344 = vcmp.eq.s32.totalorder %v1336, 1
        %vm1345 = vcmp.eq.s32.totalorder %v1337, 1
        %v1346 = vsel %vm1338, %v1329, 0.0
        %v1347 = vsel %vm1339, %v1328, 0.0
        %v1348 = vsel %vm1340, %v1327, 0.0
        %v1349 = vsel %vm1341, %v1326, 0.0
        %v1350 = vsel %vm1342, %v1325, 0.0
        %v1351 = vsel %vm1343, %v1324, 0.0
        %v1352 = vsel %vm1344, %v1323, 0.0
        %v1353 = vsel %vm1345, %v1322, 0.0
        %v1354 = vrot.slane %v1168, 1
        %v1355 = vrot.slane %v1169, 1
        %v1356 = vrot.slane %v1170, 1
        %v1357 = vrot.slane %v1171, 1
        %v1358 = vrot.slane %v1172, 1
        %v1359 = vrot.slane %v1173, 1
        %v1360 = vrot.slane %v1174, 1
        %v1361 = vrot.slane %v1175, 1
        %vm1362 = vcmp.lt.s32.totalorder %v1177, 7
        %v1363 = vsel %vm1362, %v1360, %v1361
        %v1364 = vsel %vm1362, %v1359, %v1360
        %v1365 = vsel %vm1362, %v1358, %v1359
        %v1366 = vsel %vm1362, %v1357, %v1358
        %v1367 = vsel %vm1362, %v1356, %v1357
        %v1368 = vsel %vm1362, %v1355, %v1356
        %v1369 = vsel %vm1362, %v1354, %v1355
        %v1370 = vsel %vm1362, %v1361, %v1354
        %v1371 = vsel %vm1289, 1, 0
        %v1372 = vsel %vm1290, 1, 0
        %v1373 = vsel %vm1291, 1, 0
        %v1374 = vsel %vm1292, 1, 0
        %v1375 = vsel %vm1293, 1, 0
        %v1376 = vsel %vm1294, 1, 0
        %v1377 = vsel %vm1295, 1, 0
        %v1378 = vsel %vm1296, 1, 0
        %vm1379 = vcmp.eq.s32.totalorder %v1371, 1
        %vm1380 = vcmp.eq.s32.totalorder %v1372, 1
        %vm1381 = vcmp.eq.s32.totalorder %v1373, 1
        %vm1382 = vcmp.eq.s32.totalorder %v1374, 1
        %vm1383 = vcmp.eq.s32.totalorder %v1375, 1
        %vm1384 = vcmp.eq.s32.totalorder %v1376, 1
        %vm1385 = vcmp.eq.s32.totalorder %v1377, 1
        %vm1386 = vcmp.eq.s32.totalorder %v1378, 1
        %v1387 = vsel %vm1379, %v1369, 0.0
        %v1388 = vsel %vm1380, %v1368, 0.0
        %v1389 = vsel %vm1381, %v1367, 0.0
        %v1390 = vsel %vm1382, %v1366, 0.0
        %v1391 = vsel %vm1383, %v1365, 0.0
        %v1392 = vsel %vm1384, %v1364, 0.0
        %v1393 = vsel %vm1385, %v1363, 0.0
        %v1394 = vsel %vm1386, %v1370, 0.0
        %v1395 = vld [vmem:[%s5 + $0x3] sm:$0x1]
        %v1396 = vperm.slane %v1395, 0
        %v1397 = vmul.f32 %v1346, %v1396
        %v1398 = vmul.f32 %v1347, %v1396
        %v1399 = vmul.f32 %v1348, %v1396
        %v1400 = vmul.f32 %v1349, %v1396
        %v1401 = vmul.f32 %v1350, %v1396
        %v1402 = vmul.f32 %v1351, %v1396
        %v1403 = vmul.f32 %v1352, %v1396
        %v1404 = vmul.f32 %v1353, %v1396
        %v1405 = vld [vmem:[%s5 + $0x4] sm:$0x1]
        %v1406 = vperm.slane %v1405, 0
        %v1407 = vmul.f32 %v1168, %v1406
        %v1408 = vmul.f32 %v1169, %v1406
        %v1409 = vmul.f32 %v1170, %v1406
        %v1410 = vmul.f32 %v1171, %v1406
        %v1411 = vmul.f32 %v1172, %v1406
        %v1412 = vmul.f32 %v1173, %v1406
        %v1413 = vmul.f32 %v1174, %v1406
        %v1414 = vmul.f32 %v1175, %v1406
        %v1415 = vadd.f32 %v1397, %v1407
        %v1416 = vadd.f32 %v1398, %v1408
        %v1417 = vadd.f32 %v1399, %v1409
        %v1418 = vadd.f32 %v1400, %v1410
        %v1419 = vadd.f32 %v1401, %v1411
        %v1420 = vadd.f32 %v1402, %v1412
        %v1421 = vadd.f32 %v1403, %v1413
        %v1422 = vadd.f32 %v1404, %v1414
        %v1423 = vld [vmem:[%s5 + $0x5] sm:$0x1]
        %v1424 = vperm.slane %v1423, 0
        %v1425 = vmul.f32 %v1387, %v1424
        %v1426 = vmul.f32 %v1388, %v1424
        %v1427 = vmul.f32 %v1389, %v1424
        %v1428 = vmul.f32 %v1390, %v1424
        %v1429 = vmul.f32 %v1391, %v1424
        %v1430 = vmul.f32 %v1392, %v1424
        %v1431 = vmul.f32 %v1393, %v1424
        %v1432 = vmul.f32 %v1394, %v1424
        %v1433 = vadd.f32 %v1415, %v1425
        %v1434 = vadd.f32 %v1416, %v1426
        %v1435 = vadd.f32 %v1417, %v1427
        %v1436 = vadd.f32 %v1418, %v1428
        %v1437 = vadd.f32 %v1419, %v1429
        %v1438 = vadd.f32 %v1420, %v1430
        %v1439 = vadd.f32 %v1421, %v1431
        %v1440 = vadd.f32 %v1422, %v1432
        %v1441 = vld [vmem:[%s5] sm:$0x1]
        %v1442 = vperm.slane %v1441, 0
        %v1443 = vmul.f32 %v1346, %v1442
        %v1444 = vmul.f32 %v1347, %v1442
        %v1445 = vmul.f32 %v1348, %v1442
        %v1446 = vmul.f32 %v1349, %v1442
        %v1447 = vmul.f32 %v1350, %v1442
        %v1448 = vmul.f32 %v1351, %v1442
        %v1449 = vmul.f32 %v1352, %v1442
        %v1450 = vmul.f32 %v1353, %v1442
        %v1451 = vld [vmem:[%s5 + $0x1] sm:$0x1]
        %v1452 = vperm.slane %v1451, 0
        %v1453 = vmul.f32 %v1168, %v1452
        %v1454 = vmul.f32 %v1169, %v1452
        %v1455 = vmul.f32 %v1170, %v1452
        %v1456 = vmul.f32 %v1171, %v1452
        %v1457 = vmul.f32 %v1172, %v1452
        %v1458 = vmul.f32 %v1173, %v1452
        %v1459 = vmul.f32 %v1174, %v1452
        %v1460 = vmul.f32 %v1175, %v1452
        %v1461 = vadd.f32 %v1443, %v1453
        %v1462 = vadd.f32 %v1444, %v1454
        %v1463 = vadd.f32 %v1445, %v1455
        %v1464 = vadd.f32 %v1446, %v1456
        %v1465 = vadd.f32 %v1447, %v1457
        %v1466 = vadd.f32 %v1448, %v1458
        %v1467 = vadd.f32 %v1449, %v1459
        %v1468 = vadd.f32 %v1450, %v1460
        %v1469 = vld [vmem:[%s5 + $0x2] sm:$0x1]
        %v1470 = vperm.slane %v1469, 0
        %v1471 = vmul.f32 %v1387, %v1470
        %v1472 = vmul.f32 %v1388, %v1470
        %v1473 = vmul.f32 %v1389, %v1470
        %v1474 = vmul.f32 %v1390, %v1470
        %v1475 = vmul.f32 %v1391, %v1470
        %v1476 = vmul.f32 %v1392, %v1470
        %v1477 = vmul.f32 %v1393, %v1470
        %v1478 = vmul.f32 %v1394, %v1470
        %v1479 = vadd.f32 %v1461, %v1471
        %v1480 = vadd.f32 %v1462, %v1472
        %v1481 = vadd.f32 %v1463, %v1473
        %v1482 = vadd.f32 %v1464, %v1474
        %v1483 = vadd.f32 %v1465, %v1475
        %v1484 = vadd.f32 %v1466, %v1476
        %v1485 = vadd.f32 %v1467, %v1477
        %v1486 = vadd.f32 %v1468, %v1478
        %v1487 = vsel %vm1297, 1, 0
        %v1488 = vsel %vm1298, 1, 0
        %v1489 = vsel %vm1299, 1, 0
        %v1490 = vsel %vm1300, 1, 0
        %v1491 = vsel %vm1301, 1, 0
        %v1492 = vsel %vm1302, 1, 0
        %v1493 = vsel %vm1303, 1, 0
        %v1494 = vsel %vm1304, 1, 0
        %vm1495 = vcmp.eq.s32.totalorder %v1487, 1
        %vm1496 = vcmp.eq.s32.totalorder %v1488, 1
        %vm1497 = vcmp.eq.s32.totalorder %v1489, 1
        %vm1498 = vcmp.eq.s32.totalorder %v1490, 1
        %vm1499 = vcmp.eq.s32.totalorder %v1491, 1
        %vm1500 = vcmp.eq.s32.totalorder %v1492, 1
        %vm1501 = vcmp.eq.s32.totalorder %v1493, 1
        %vm1502 = vcmp.eq.s32.totalorder %v1494, 1
        %v1503 = vsel %vm1495, %v1486, 0.0
        %v1504 = vsel %vm1496, %v1479, 0.0
        %v1505 = vsel %vm1497, %v1480, 0.0
        %v1506 = vsel %vm1498, %v1481, 0.0
        %v1507 = vsel %vm1499, %v1482, 0.0
        %v1508 = vsel %vm1500, %v1483, 0.0
        %v1509 = vsel %vm1501, %v1484, 0.0
        %v1510 = vsel %vm1502, %v1485, 0.0
        %v1511 = vadd.f32 %v1433, %v1503
        %v1512 = vadd.f32 %v1434, %v1504
        %v1513 = vadd.f32 %v1435, %v1505
        %v1514 = vadd.f32 %v1436, %v1506
        %v1515 = vadd.f32 %v1437, %v1507
        %v1516 = vadd.f32 %v1438, %v1508
        %v1517 = vadd.f32 %v1439, %v1509
        %v1518 = vadd.f32 %v1440, %v1510
        %v1519 = vld [vmem:[%s5 + $0x6] sm:$0x1]
        %v1520 = vperm.slane %v1519, 0
        %v1521 = vmul.f32 %v1346, %v1520
        %v1522 = vmul.f32 %v1347, %v1520
        %v1523 = vmul.f32 %v1348, %v1520
        %v1524 = vmul.f32 %v1349, %v1520
        %v1525 = vmul.f32 %v1350, %v1520
        %v1526 = vmul.f32 %v1351, %v1520
        %v1527 = vmul.f32 %v1352, %v1520
        %v1528 = vmul.f32 %v1353, %v1520
        %v1529 = vld [vmem:[%s5 + $0x7] sm:$0x1]
        %v1530 = vperm.slane %v1529, 0
        %v1531 = vmul.f32 %v1168, %v1530
        %v1532 = vmul.f32 %v1169, %v1530
        %v1533 = vmul.f32 %v1170, %v1530
        %v1534 = vmul.f32 %v1171, %v1530
        %v1535 = vmul.f32 %v1172, %v1530
        %v1536 = vmul.f32 %v1173, %v1530
        %v1537 = vmul.f32 %v1174, %v1530
        %v1538 = vmul.f32 %v1175, %v1530
        %v1539 = vadd.f32 %v1521, %v1531
        %v1540 = vadd.f32 %v1522, %v1532
        %v1541 = vadd.f32 %v1523, %v1533
        %v1542 = vadd.f32 %v1524, %v1534
        %v1543 = vadd.f32 %v1525, %v1535
        %v1544 = vadd.f32 %v1526, %v1536
        %v1545 = vadd.f32 %v1527, %v1537
        %v1546 = vadd.f32 %v1528, %v1538
        %v1547 = vld [vmem:[%s5 + $0x8] sm:$0x1]
        %v1548 = vperm.slane %v1547, 0
        %v1549 = vmul.f32 %v1387, %v1548
        %v1550 = vmul.f32 %v1388, %v1548
        %v1551 = vmul.f32 %v1389, %v1548
        %v1552 = vmul.f32 %v1390, %v1548
        %v1553 = vmul.f32 %v1391, %v1548
        %v1554 = vmul.f32 %v1392, %v1548
        %v1555 = vmul.f32 %v1393, %v1548
        %v1556 = vmul.f32 %v1394, %v1548
        %v1557 = vadd.f32 %v1539, %v1549
        %v1558 = vadd.f32 %v1540, %v1550
        %v1559 = vadd.f32 %v1541, %v1551
        %v1560 = vadd.f32 %v1542, %v1552
        %v1561 = vadd.f32 %v1543, %v1553
        %v1562 = vadd.f32 %v1544, %v1554
        %v1563 = vadd.f32 %v1545, %v1555
        %v1564 = vadd.f32 %v1546, %v1556
        %v1565 = vsel %vm1305, 1, 0
        %v1566 = vsel %vm1306, 1, 0
        %v1567 = vsel %vm1307, 1, 0
        %v1568 = vsel %vm1308, 1, 0
        %v1569 = vsel %vm1309, 1, 0
        %v1570 = vsel %vm1310, 1, 0
        %v1571 = vsel %vm1311, 1, 0
        %v1572 = vsel %vm1312, 1, 0
        %vm1573 = vcmp.eq.s32.totalorder %v1565, 1
        %vm1574 = vcmp.eq.s32.totalorder %v1566, 1
        %vm1575 = vcmp.eq.s32.totalorder %v1567, 1
        %vm1576 = vcmp.eq.s32.totalorder %v1568, 1
        %vm1577 = vcmp.eq.s32.totalorder %v1569, 1
        %vm1578 = vcmp.eq.s32.totalorder %v1570, 1
        %vm1579 = vcmp.eq.s32.totalorder %v1571, 1
        %vm1580 = vcmp.eq.s32.totalorder %v1572, 1
        %v1581 = vsel %vm1573, %v1558, 0.0
        %v1582 = vsel %vm1574, %v1559, 0.0
        %v1583 = vsel %vm1575, %v1560, 0.0
        %v1584 = vsel %vm1576, %v1561, 0.0
        %v1585 = vsel %vm1577, %v1562, 0.0
        %v1586 = vsel %vm1578, %v1563, 0.0
        %v1587 = vsel %vm1579, %v1564, 0.0
        %v1588 = vsel %vm1580, %v1557, 0.0
        %v1589 = vadd.f32 %v1511, %v1581
        %v1590 = vadd.f32 %v1512, %v1582
        %v1591 = vadd.f32 %v1513, %v1583
        %v1592 = vadd.f32 %v1514, %v1584
        %v1593 = vadd.f32 %v1515, %v1585
        %v1594 = vadd.f32 %v1516, %v1586
        %v1595 = vadd.f32 %v1517, %v1587
        %v1596 = vadd.f32 %v1518, %v1588
        %v1597 = vld [vmem:[%s6] sm:$0x1]
        %v1599 = vperm.slane %v1597, 0
        %v1601 = vadd.f32 %v1589, %v1599
        %v1602 = vadd.f32 %v1590, %v1599
        %v1603 = vadd.f32 %v1591, %v1599
        %v1604 = vadd.f32 %v1592, %v1599
        %v1605 = vadd.f32 %v1593, %v1599
        %v1606 = vadd.f32 %v1594, %v1599
        %v1607 = vadd.f32 %v1595, %v1599
        %v1608 = vadd.f32 %v1596, %v1599
        %v1609 = vsub.f32 0.0, %v1601
        %v1610 = vsub.f32 0.0, %v1602
        %v1611 = vsub.f32 0.0, %v1603
        %v1612 = vsub.f32 0.0, %v1604
        %v1613 = vsub.f32 0.0, %v1605
        %v1614 = vsub.f32 0.0, %v1606
        %v1615 = vsub.f32 0.0, %v1607
        %v1616 = vsub.f32 0.0, %v1608
        %v1617 = vmul.f32 %v1609, 1.442695
        %v1618 = vpow.pop %v1617
        %v1619 = vmul.f32 %v1610, 1.442695
        %v1620 = vpow.pop %v1619
        %v1621 = vmul.f32 %v1611, 1.442695
        %v1622 = vpow.pop %v1621
        %v1623 = vmul.f32 %v1612, 1.442695
        %v1624 = vpow.pop %v1623
        %v1625 = vmul.f32 %v1613, 1.442695
        %v1626 = vpow.pop %v1625
        %v1627 = vmul.f32 %v1614, 1.442695
        %v1628 = vpow.pop %v1627
        %v1629 = vmul.f32 %v1615, 1.442695
        %v1630 = vpow.pop %v1629
        %v1631 = vmul.f32 %v1616, 1.442695
        %v1632 = vpow.pop %v1631
        %v1633 = vadd.f32 %v1618, 1.0
        %v1634 = vadd.f32 %v1620, 1.0
        %v1635 = vadd.f32 %v1622, 1.0
        %v1636 = vadd.f32 %v1624, 1.0
        %v1637 = vadd.f32 %v1626, 1.0
        %v1638 = vadd.f32 %v1628, 1.0
        %v1639 = vadd.f32 %v1630, 1.0
        %v1640 = vadd.f32 %v1632, 1.0
        %v1641 = vrcp.pop %v1633
        %v1642 = vrcp.pop %v1634
        %v1643 = vrcp.pop %v1635
        %v1644 = vrcp.pop %v1636
        %v1645 = vrcp.pop %v1637
        %v1646 = vrcp.pop %v1638
        %v1647 = vrcp.pop %v1639
        %v1648 = vrcp.pop %v1640
        %v1649 = vmul.f32 %v1601, %v1641
        %v1650 = vmul.f32 %v1602, %v1642
        %v1651 = vmul.f32 %v1603, %v1643
        %v1652 = vmul.f32 %v1604, %v1644
        %v1653 = vmul.f32 %v1605, %v1645
        %v1654 = vmul.f32 %v1606, %v1646
        %v1655 = vmul.f32 %v1607, %v1647
        %v1656 = vmul.f32 %v1608, %v1648
        %v1657 = vsel %vm907, %v1649, 0.0
        %v1658 = vsel %vm907, %v1650, 0.0
        %v1659 = vadd.f32 %v1657, %v1658
        %v1660 = vsel %vm907, %v1651, 0.0
        %v1661 = vadd.f32 %v1659, %v1660
        %v1662 = vsel %vm907, %v1652, 0.0
        %v1663 = vadd.f32 %v1661, %v1662
        %v1664 = vsel %vm907, %v1653, 0.0
        %v1665 = vadd.f32 %v1663, %v1664
        %v1666 = vsel %vm907, %v1654, 0.0
        %v1667 = vadd.f32 %v1665, %v1666
        %v1668 = vsel %vm907, %v1655, 0.0
        %v1669 = vadd.f32 %v1667, %v1668
        %v1670 = vsel %vm907, %v1656, 0.0
        %v1671 = vadd.f32 %v1669, %v1670
        %v1672 = vrot.slane %v1671, 4
        %v1673 = vadd.f32 %v1671, %v1672
        %v1674 = vrot.slane %v1673, 2
        %v1675 = vadd.f32 %v1673, %v1674
        %v1676 = vrot.slane %v1675, 1
        %v1677 = vadd.f32 %v1675, %v1676
        %v1678 = vmul.f32 %v1677, 0.015625
        %v1679 = vpack.c.bf16 %v1678, %v1678
        %v1680 = vld [vmem:[%s7] sm:$0xf]
        %v1681 = vld [vmem:[%s7 + $0x4] sm:$0xf]
        %v1682 = vld [vmem:[%s8] sm:$0x1]
        %v1685 = vunpack.c.l.b16 %v1680
        %v1686 = vunpack.c.l.b16 %v1681
        %v1687 = vpack.c.b16 %v1686, %v1685
        %v1690 = vsel %vm907, %v1679, 0
        %1692 = vmatpush.bf16.msra.mxu0 0
        %1693 = vmatpush.bf16.msra.mxu0 0
        %1694 = vmatpush.bf16.msra.mxu0 0
        %1695 = vmatpush.bf16.msra.mxu0 0
        %1696 = vmatpush.bf16.msra.mxu0 0
        %1697 = vmatpush.bf16.msra.mxu0 0
        %1698 = vmatpush.bf16.msra.mxu0 0
        %1699 = vmatpush.bf16.msra.mxu0 %v1687
        %1700 = vmatmul.bf16.gmra.mxu0 %v1690
        %v1701 = vpop.f32.mrf.mxu0
        %v1702 = vadd.f32 %v1682, %v1701
        %v1703 = vpop.f32.mrf.mxu0
        %1704 = vdwg.mxu0
        %v1705 = vsub.f32 0.0, %v1702
        %v1706 = vmul.f32 %v1705, 1.442695
        %v1707 = vpow.pop %v1706
        %v1708 = vadd.f32 %v1707, 1.0
        %v1709 = vrcp.pop %v1708
        %v1710 = vmul.f32 %v1702, %v1709
        %v1711 = vpack.c.bf16 %v1710, %v1710
        %v1712 = vld [vmem:[%s9] sm:$0x1]
        %v1713 = vld [vmem:[%s10] sm:$0x1]
        %vm1714 = vcmask 15360
        %v1716 = vsel %vm1714, %v1711, 0
        %vm1718 = vcmask 1040384
        %v1720 = vsel %vm1718, %v1712, 0
        %1722 = vmatpush.bf16.msra.mxu0 0
        %1723 = vmatpush.bf16.msra.mxu0 0
        %1724 = vmatpush.bf16.msra.mxu0 0
        %1725 = vmatpush.bf16.msra.mxu0 0
        %1726 = vmatpush.bf16.msra.mxu0 0
        %1727 = vmatpush.bf16.msra.mxu0 0
        %1728 = vmatpush.bf16.msra.mxu0 0
        %1729 = vmatpush.bf16.msra.mxu0 %v1720
        %1730 = vmatmul.bf16.gmra.mxu0 %v1716
        %v1731 = vpop.f32.mrf.mxu0
        %v1732 = vadd.f32 %v1713, %v1731
        %v1733 = vpop.f32.mrf.mxu0
        %1734 = vdwg.mxu0
        %v1735 = vsub.f32 0.0, %v1732
        %v1736 = vmul.f32 %v1735, 1.442695
        %v1737 = vpow.pop %v1736
        %v1738 = vadd.f32 %v1737, 1.0
        %v1739 = vrcp.pop %v1738
        %v1740 = vperm.slane %v1739, 0
        %v1741 = vmul.f32 %v1649, %v1740
        %v1742 = vmul.f32 %v1650, %v1740
        %v1743 = vmul.f32 %v1651, %v1740
        %v1744 = vmul.f32 %v1652, %v1740
        %v1745 = vmul.f32 %v1653, %v1740
        %v1746 = vmul.f32 %v1654, %v1740
        %v1747 = vmul.f32 %v1655, %v1740
        %v1748 = vmul.f32 %v1656, %v1740
        %v1749 = vpack.c.bf16 %v1742, %v1741
        %v1750 = vpack.c.bf16 %v1744, %v1743
        %v1751 = vpack.c.bf16 %v1746, %v1745
        %v1752 = vpack.c.bf16 %v1748, %v1747
        %v1753 = vld [vmem:[%s11] sm:$0xf]
        %v1754 = vld [vmem:[%s11 + $0x4] sm:$0xf]
        %v1755 = vld [vmem:[%s12] sm:$0x1]
        %v1757 = vperm.slane %v1755, 0
        %v1761 = vunpack.c.l.b16 %v1753
        %v1762 = vunpack.c.l.b16 %v1754
        %v1763 = vpack.c.b16 %v1762, %v1761
        %v1766 = vsel %vm907, %v1749, 0
        %v1769 = vsel %vm907, %v1750, 0
        %v1772 = vsel %vm907, %v1751, 0
        %v1775 = vsel %vm907, %v1752, 0
        %1777 = vmatpush.bf16.msra.mxu0 0
        %1778 = vmatpush.bf16.msra.mxu0 0
        %1779 = vmatpush.bf16.msra.mxu0 0
        %1780 = vmatpush.bf16.msra.mxu0 0
        %1781 = vmatpush.bf16.msra.mxu0 0
        %1782 = vmatpush.bf16.msra.mxu0 0
        %1783 = vmatpush.bf16.msra.mxu0 0
        %1784 = vmatpush.bf16.msra.mxu0 %v1763
        %1785 = vmatmul.bf16.gmra.mxu0 %v1766
        %v1786 = vpop.f32.mrf.mxu0
        %v1787 = vadd.f32 %v1757, %v1786
        %v1788 = vpop.f32.mrf.mxu0
        %v1789 = vadd.f32 %v1757, %v1788
        %1790 = vmatmul.bf16.gmra.mxu0 %v1769
        %v1791 = vpop.f32.mrf.mxu0
        %v1792 = vadd.f32 %v1757, %v1791
        %v1793 = vpop.f32.mrf.mxu0
        %v1794 = vadd.f32 %v1757, %v1793
        %1795 = vmatmul.bf16.gmra.mxu0 %v1772
        %v1796 = vpop.f32.mrf.mxu0
        %v1797 = vadd.f32 %v1757, %v1796
        %v1798 = vpop.f32.mrf.mxu0
        %v1799 = vadd.f32 %v1757, %v1798
        %1800 = vmatmul.bf16.gmra.mxu0 %v1775
        %v1801 = vpop.f32.mrf.mxu0
        %v1802 = vadd.f32 %v1757, %v1801
        %v1803 = vpop.f32.mrf.mxu0
        %v1804 = vadd.f32 %v1757, %v1803
        %1805 = vdwg.mxu0
        %v1806 = vadd.f32 %v1066, %v1787
        %v1807 = vadd.f32 %v1067, %v1789
        %v1808 = vadd.f32 %v1068, %v1792
        %v1809 = vadd.f32 %v1069, %v1794
        %v1810 = vadd.f32 %v1070, %v1797
        %v1811 = vadd.f32 %v1071, %v1799
        %v1812 = vadd.f32 %v1072, %v1802
        %v1813 = vadd.f32 %v1073, %v1804
        %v1814 = vpack.c.bf16 %v1807, %v1806
        %v1815 = vpack.c.bf16 %v1809, %v1808
        %v1816 = vpack.c.bf16 %v1811, %v1810
        %v1817 = vpack.c.bf16 %v1813, %v1812
        %v1818 = vld [vmem:[%s13] sm:$0xf]
        %v1819 = vld [vmem:[%s14] sm:$0x1]
        %v1821 = vperm.slane %v1819, 0
        %v1824 = vsel %vm889, %v1814, 0
        %v1827 = vsel %vm889, %v1815, 0
        %v1830 = vsel %vm889, %v1816, 0
        %v1833 = vsel %vm889, %v1817, 0
        %v1836 = vsel %vm1095, %v1818, 0
        %1838 = vmatpush.bf16.msra.mxu0 0
        %1839 = vmatpush.bf16.msra.mxu0 0
        %1840 = vmatpush.bf16.msra.mxu0 0
        %1841 = vmatpush.bf16.msra.mxu0 0
        %1842 = vmatpush.bf16.msra.mxu0 0
        %1843 = vmatpush.bf16.msra.mxu0 0
        %1844 = vmatpush.bf16.msra.mxu0 0
        %1845 = vmatpush.bf16.msra.mxu0 %v1836
        %1846 = vmatmul.bf16.gmra.mxu0 %v1824
        %v1847 = vpop.f32.mrf.mxu0
        %v1848 = vadd.f32 %v1821, %v1847
        %v1849 = vpop.f32.mrf.mxu0
        %v1850 = vadd.f32 %v1821, %v1849
        %1851 = vmatmul.bf16.gmra.mxu0 %v1827
        %v1852 = vpop.f32.mrf.mxu0
        %v1853 = vadd.f32 %v1821, %v1852
        %v1854 = vpop.f32.mrf.mxu0
        %v1855 = vadd.f32 %v1821, %v1854
        %1856 = vmatmul.bf16.gmra.mxu0 %v1830
        %v1857 = vpop.f32.mrf.mxu0
        %v1858 = vadd.f32 %v1821, %v1857
        %v1859 = vpop.f32.mrf.mxu0
        %v1860 = vadd.f32 %v1821, %v1859
        %1861 = vmatmul.bf16.gmra.mxu0 %v1833
        %v1862 = vpop.f32.mrf.mxu0
        %v1863 = vadd.f32 %v1821, %v1862
        %v1864 = vpop.f32.mrf.mxu0
        %v1865 = vadd.f32 %v1821, %v1864
        %1866 = vdwg.mxu0
        %v1867 = vsub.f32 0.0, %v1848
        %v1868 = vsub.f32 0.0, %v1850
        %v1869 = vsub.f32 0.0, %v1853
        %v1870 = vsub.f32 0.0, %v1855
        %v1871 = vsub.f32 0.0, %v1858
        %v1872 = vsub.f32 0.0, %v1860
        %v1873 = vsub.f32 0.0, %v1863
        %v1874 = vsub.f32 0.0, %v1865
        %v1875 = vmul.f32 %v1867, 1.442695
        %v1876 = vpow.pop %v1875
        %v1877 = vmul.f32 %v1868, 1.442695
        %v1878 = vpow.pop %v1877
        %v1879 = vmul.f32 %v1869, 1.442695
        %v1880 = vpow.pop %v1879
        %v1881 = vmul.f32 %v1870, 1.442695
        %v1882 = vpow.pop %v1881
        %v1883 = vmul.f32 %v1871, 1.442695
        %v1884 = vpow.pop %v1883
        %v1885 = vmul.f32 %v1872, 1.442695
        %v1886 = vpow.pop %v1885
        %v1887 = vmul.f32 %v1873, 1.442695
        %v1888 = vpow.pop %v1887
        %v1889 = vmul.f32 %v1874, 1.442695
        %v1890 = vpow.pop %v1889
        %v1891 = vadd.f32 %v1876, 1.0
        %v1892 = vadd.f32 %v1878, 1.0
        %v1893 = vadd.f32 %v1880, 1.0
        %v1894 = vadd.f32 %v1882, 1.0
        %v1895 = vadd.f32 %v1884, 1.0
        %v1896 = vadd.f32 %v1886, 1.0
        %v1897 = vadd.f32 %v1888, 1.0
        %v1898 = vadd.f32 %v1890, 1.0
        %v1899 = vrcp.pop %v1891
        %v1900 = vrcp.pop %v1892
        %v1901 = vrcp.pop %v1893
        %v1902 = vrcp.pop %v1894
        %v1903 = vrcp.pop %v1895
        %v1904 = vrcp.pop %v1896
        %v1905 = vrcp.pop %v1897
        %v1906 = vrcp.pop %v1898
        %v1907 = vmul.f32 %v1848, %v1899
        %v1908 = vmul.f32 %v1850, %v1900
        %v1909 = vmul.f32 %v1853, %v1901
        %v1910 = vmul.f32 %v1855, %v1902
        %v1911 = vmul.f32 %v1858, %v1903
        %v1912 = vmul.f32 %v1860, %v1904
        %v1913 = vmul.f32 %v1863, %v1905
        %v1914 = vmul.f32 %v1865, %v1906
        %v1915 = vsel %vm943, %v1907, 0.0
        %v1916 = vsel %vm943, %v1908, 0.0
        %v1917 = vadd.f32 %v1915, %v1916
        %v1918 = vsel %vm943, %v1909, 0.0
        %v1919 = vadd.f32 %v1917, %v1918
        %v1920 = vsel %vm943, %v1910, 0.0
        %v1921 = vadd.f32 %v1919, %v1920
        %v1922 = vsel %vm943, %v1911, 0.0
        %v1923 = vadd.f32 %v1921, %v1922
        %v1924 = vsel %vm943, %v1912, 0.0
        %v1925 = vadd.f32 %v1923, %v1924
        %v1926 = vsel %vm943, %v1913, 0.0
        %v1927 = vadd.f32 %v1925, %v1926
        %v1928 = vsel %vm943, %v1914, 0.0
        %v1929 = vadd.f32 %v1927, %v1928
        %v1930 = vrot.slane %v1929, 4
        %v1931 = vadd.f32 %v1929, %v1930
        %v1932 = vrot.slane %v1931, 2
        %v1933 = vadd.f32 %v1931, %v1932
        %v1934 = vrot.slane %v1933, 1
        %v1935 = vadd.f32 %v1933, %v1934
        %v1936 = vmul.f32 %v1935, 0.015625
        %v1937 = vpack.c.bf16 %v1936, %v1936
        %v1938 = vld [vmem:[%s15] sm:$0xf]
        %v1939 = vld [vmem:[%s15 + $0x4] sm:$0xf]
        %v1940 = vld [vmem:[%s15 + $0x8] sm:$0xf]
        %v1941 = vld [vmem:[%s15 + $0xc] sm:$0xf]
        %v1942 = vld [vmem:[%s16] sm:$0x1]
        %v1947 = vunpack.c.l.b16 %v1938
        %v1948 = vunpack.c.l.b16 %v1939
        %v1949 = vunpack.c.l.b16 %v1940
        %v1950 = vunpack.c.l.b16 %v1941
        %v1951 = vpack.c.b16 %v1948, %v1947
        %v1952 = vpack.c.b16 %v1950, %v1949
        %v1956 = vsel %vm943, %v1937, 0
        %1958 = vmatpush.bf16.msra.mxu0 0
        %1959 = vmatpush.bf16.msra.mxu0 0
        %1960 = vmatpush.bf16.msra.mxu0 0
        %1961 = vmatpush.bf16.msra.mxu0 0
        %1962 = vmatpush.bf16.msra.mxu0 0
        %1963 = vmatpush.bf16.msra.mxu0 0
        %1964 = vmatpush.bf16.msra.mxu0 %v1952
        %1965 = vmatpush.bf16.msra.mxu0 %v1951
        %1966 = vmatmul.bf16.gmra.mxu0 %v1956
        %v1967 = vpop.f32.mrf.mxu0
        %v1968 = vadd.f32 %v1942, %v1967
        %v1969 = vpop.f32.mrf.mxu0
        %1970 = vdwg.mxu0
        %vm1971 = vcmask 16384
        %1972 = vst.msk [vmem:[%s540] sm:$0x1] %vm1971, %v1968
        %s1973 = sand.u32 %s401, 1
        %s1974 = scalar_lea.sflag [#allocation3], %s1973
        %s1975 = sand.u32 %s401, 1
        %s1976 = scalar_lea.vmem [#allocation2], %s1975
        // Predicated region
        $region89: #{efficientnet_gen1vsrest_forward.1} parent=87 // pred_check
          %p1977 = pneg %p411
        $region90: #{efficientnet_gen1vsrest_forward.1} parent=87 // pred_check_branch
          %1979 = sbr.rel (%p1977) target = $region92
        $region91: #{efficientnet_gen1vsrest_forward.1} parent=87 // pred_region
          %1981 = vsyncadd %s1974, 0
          %s1982 = scalar_lea.hbm %s17, %s31
          %s1984 = sshll.u32 %s1976, 4
          %s1985 = int_to_ptr.vmem [resolvable:$true] %s1984
          %s1986 = sshll.u32 %s1982, 4
          %s1987 = int_to_ptr.hbm [resolvable:$true] %s1986
          %1989 = dma.vmem_to_hbm [thread:$0]  %s1985, 16, %s1987, %s1974
        $region92: #{efficientnet_gen1vsrest_forward.1} parent=87 // pred_fallthru
          _
      $region88: #{efficientnet_gen1vsrest_forward.1} parent=5 // pred_fallthru
        _
      %p1990 = scmp.le.s32.totalorder 2, %s26
      // Predicated region
      $region93: #{efficientnet_gen1vsrest_forward.1} parent=5 // pred_check
        %p1991 = pneg %p1990
      $region94: #{efficientnet_gen1vsrest_forward.1} parent=5 // pred_check_branch
        %1993 = sbr.rel (%p1991) target = $region96
      $region95: #{efficientnet_gen1vsrest_forward.1} parent=5 // pred_region
        %s1994 = ssub.s32 %s26, 2
        // Predicated region
        $region97: #{efficientnet_gen1vsrest_forward.1} parent=95 // pred_check
          %p1995 = pneg %p417
        $region98: #{efficientnet_gen1vsrest_forward.1} parent=95 // pred_check_branch
          %1997 = sbr.rel (%p1995) target = $region100
        $region99: #{efficientnet_gen1vsrest_forward.1} parent=95 // pred_region
          %s1998 = sand.u32 %s402, 1
          %s1999 = scalar_lea.sflag [#allocation3], %s1998
          %s2000 = sand.u32 %s402, 1
          %s2001 = scalar_lea.vmem [#allocation2], %s2000
          %2003 = dma.done %s1999, 16
        $region100: #{efficientnet_gen1vsrest_forward.1} parent=95 // pred_fallthru
          _
      $region96: #{efficientnet_gen1vsrest_forward.1} parent=5 // pred_fallthru
        _
    $region6: #{efficientnet_gen1vsrest_forward.1} parent=1 // loop_footer
      %s30 = sadd.s32 1, %s26
    $region7: #{efficientnet_gen1vsrest_forward.1} parent=1 // loop_footer_branch
      %25 = sbr.rel target = $region3
    $region8: #{efficientnet_gen1vsrest_forward.1} parent=1 // loop_exit
      _
    %2004 = vsyncpa [#allocation3], 1
    %s2005 = scalar_lea.sflag [#allocation3], 1
    %2006 = vsyncpa %s2005, 1

</llo_original>
